<compile_context>
chip_gen: v7x
topology: tpu7x:2x2x1
jax: 0.10.0
libtpu: 0.0.40
codegen_flags: <defaults>
</compile_context>

<pallas_src>
import functools
import math

import jax
import jax.numpy as jnp
import numpy as np
from jax import lax
from jax.experimental import pallas as pl
from jax.experimental.pallas import tpu as pltpu


def _attn_kernel(x_ref, wq_ref, wk_ref, wv_ref, wo_ref, o_ref,
                 k_s, v_s, *, d_head, num_heads, tq, seq_len):
    """One (batch, query-tile) step: cached K/V proj, causal flash softmax, fused O proj."""
    qt = pl.program_id(1)
    cdtype = x_ref.dtype

    # ---- K / V projections: once per batch --------------------------------------
    # Scratch persists across grid steps; the qt axis is innermost and "arbitrary",
    # so every query tile of this batch sees the K/V computed at qt == 0.
    @pl.when(qt == 0)
    def _():
        x_full = x_ref[0]                                            # (S, D)
        k_s[...] = jnp.dot(x_full, wk_ref[...],
                           preferred_element_type=jnp.float32).astype(cdtype)
        v_s[...] = jnp.dot(x_full, wv_ref[...],
                           preferred_element_type=jnp.float32).astype(cdtype)

    # ---- Q projection for this query tile (1/sqrt(d_head) folded into Q) --------
    q_start = pl.multiple_of(qt * tq, tq)
    if tq == seq_len:
        xq = x_ref[0]                                                # single query tile
    else:
        xq = x_ref[0, pl.ds(q_start, tq), :]                         # (TQ, D)
    inv_sqrt_dh = jnp.float32(1.0 / math.sqrt(d_head))
    q_all = (jnp.dot(xq, wq_ref[...], preferred_element_type=jnp.float32)
             * inv_sqrt_dh).astype(cdtype)                           # (TQ, H*Dh)

    # ---- Causal-mask index grids for one (TQ, TK=TQ) key tile (hoisted) ---------
    row = q_start + lax.broadcasted_iota(jnp.int32, (tq, tq), 0)     # global query idx
    col_local = lax.broadcasted_iota(jnp.int32, (tq, tq), 1)         # local key idx
    neg_big = jnp.float32(-1e30)

    # ---- Per-head attention: flash-style loop over visible key tiles only -------
    z_heads = []
    for h in range(num_heads):
        off = h * d_head
        qh = q_all[:, off:off + d_head]                              # (TQ, Dh)

        def kv_step(kv, carry):
            m_prev, l_prev, acc_prev = carry
            kv_start = pl.multiple_of(kv * tq, tq)
            kh = k_s[pl.ds(kv_start, tq), pl.ds(off, d_head)]        # (TK, Dh)
            vh = v_s[pl.ds(kv_start, tq), pl.ds(off, d_head)]        # (TK, Dh)
            # scores: contract the head dim directly (A @ B^T pattern, MXU native).
            s = lax.dot_general(qh, kh, (((1,), (1,)), ((), ())),
                                preferred_element_type=jnp.float32)  # (TQ, TK)
            s = jnp.where(kv_start + col_local <= row, s, neg_big)   # causal mask
            m_cur = jnp.max(s, axis=-1, keepdims=True)
            m_new = jnp.maximum(m_prev, m_cur)
            alpha = jnp.exp(m_prev - m_new)
            p = jnp.exp(s - m_new)
            l_new = alpha * l_prev + jnp.sum(p, axis=-1, keepdims=True)
            acc_new = alpha * acc_prev + jnp.dot(
                p.astype(cdtype), vh, preferred_element_type=jnp.float32)
            return m_new, l_new, acc_new

        init = (jnp.full((tq, 1), -1e30, jnp.float32),
                jnp.zeros((tq, 1), jnp.float32),
                jnp.zeros((tq, d_head), jnp.float32))
        # Causality: only key tiles 0..qt can be attended to by this query tile.
        _, l_f, acc_f = lax.fori_loop(0, qt + 1, kv_step, init)
        z_heads.append((acc_f / l_f).astype(cdtype))                 # exact denominator

    # ---- Fused output projection: the sum over heads happens inside this matmul --
    z_all = jnp.concatenate(z_heads, axis=1)                         # (TQ, H*Dh)
    out = jnp.dot(z_all, wo_ref[...], preferred_element_type=jnp.float32)  # (TQ, D)
    o_ref[0] = out.astype(o_ref.dtype)


def _pick_tq(seq_len, max_tq=256):
    """Query tile: prefer 128-multiples, capped at 256 (fits v7x's 64 MiB VMEM)."""
    if seq_len <= max_tq:
        return seq_len
    for t in (256, 128):
        if t <= max_tq and seq_len % t == 0:
            return t
    for t in range(max_tq, 7, -8):
        if seq_len % t == 0:
            return t
    return seq_len


def attention_forward(x, w_q, w_k, w_v, w_o, *, tq=None):
    """x: (B, S, D); W_Q/W_K/W_V: (H, Dh, D); W_O: (H, D, Dh) -> (B, S, D)."""
    B, S, D = x.shape
    H, Dh, _ = w_q.shape
    HDh = H * Dh

    if tq is None:
        tq = _pick_tq(S)
    assert S % tq == 0, (S, tq)
    n_qt = S // tq

    cdtype = x.dtype
    itemsize = jnp.dtype(cdtype).itemsize

    # Pre-transpose / flatten weights in the wrapper so the kernel never transposes.
    #   q_all[p, i*Dh+h] = sum_d x[p, d] * W_Q[i, h, d]              -> wq_t: (D, H*Dh)
    #   out[q, d]        = sum_{i,h} z_all[q, i*Dh+h] * W_O[i, d, h] -> wo_t: (H*Dh, D)
    wq_t = jnp.transpose(w_q, (2, 0, 1)).reshape(D, HDh).astype(cdtype)
    wk_t = jnp.transpose(w_k, (2, 0, 1)).reshape(D, HDh).astype(cdtype)
    wv_t = jnp.transpose(w_v, (2, 0, 1)).reshape(D, HDh).astype(cdtype)
    wo_t = jnp.transpose(w_o, (0, 2, 1)).reshape(HDh, D).astype(cdtype)

    kernel = functools.partial(_attn_kernel, d_head=Dh, num_heads=H,
                               tq=tq, seq_len=S)

    flops = int(3 * 2 * B * S * D * HDh        # Q/K/V projections
                + 2 * B * S * HDh * D          # fused output projection
                + 2 * B * H * Dh * S * S)      # causal QK^T + PV (~half of dense)
    transcendentals = int(B * H * S * S // 2)  # exp in the causal softmax
    bytes_accessed = int((2 * B * S * D + 4 * D * HDh) * itemsize)

    return pl.pallas_call(
        kernel,
        out_shape=jax.ShapeDtypeStruct((B, S, D), cdtype),
        grid_spec=pltpu.PrefetchScalarGridSpec(
            num_scalar_prefetch=0,
            grid=(B, n_qt),                                       # qt innermost
            in_specs=[
                pl.BlockSpec((1, S, D), lambda b, q: (b, 0, 0)),  # x (re-DMA only on new b)
                pl.BlockSpec((D, HDh), lambda b, q: (0, 0)),      # W_Q^T (VMEM-resident)
                pl.BlockSpec((D, HDh), lambda b, q: (0, 0)),      # W_K^T
                pl.BlockSpec((D, HDh), lambda b, q: (0, 0)),      # W_V^T
                pl.BlockSpec((HDh, D), lambda b, q: (0, 0)),      # W_O flat
            ],
            out_specs=pl.BlockSpec((1, tq, D), lambda b, q: (b, q, 0)),
            scratch_shapes=[
                pltpu.VMEM((S, HDh), cdtype),   # K (persists across the qt sweep)
                pltpu.VMEM((S, HDh), cdtype),   # V
            ],
        ),
        compiler_params=pltpu.CompilerParams(
            # batch megacore-shardable; qt must be "arbitrary" so the qt==0 K/V
            # gate is valid (scratch is reused across the qt sweep).
            dimension_semantics=("parallel", "arbitrary"),
            vmem_limit_bytes=48 * 1024 * 1024,   # fits every generation incl. v7x
        ),
        cost_estimate=pl.CostEstimate(flops=flops,
                                      transcendentals=transcendentals,
                                      bytes_accessed=bytes_accessed),
    )(x, wq_t, wk_t, wv_t, wo_t)


def attention_reference(x, w_q, w_k, w_v, w_o):
    """Pure-JAX re-implementation of the PyTorch forward (output_proj=True)."""
    d_head = w_q.shape[1]
    x = x.astype(jnp.float32)
    k = jnp.einsum("ihd,bpd->biph", w_k, x)
    q = jnp.einsum("ihd,bpd->biph", w_q, x)
    v = jnp.einsum("ihd,bpd->biph", w_v, x)
    scores = jnp.einsum("biph,biqh->biqp", k, q)
    s = x.shape[-2]
    mask = jnp.tril(jnp.ones((s, s), jnp.float32))
    masked = scores * mask - 1e10 * (1.0 - mask)
    attn = jax.nn.softmax(masked / np.sqrt(d_head), axis=-1)
    z = jnp.einsum("biph,biqp->biqh", v, attn)
    result = jnp.einsum("idh,biqh->biqd", w_o, z)
    return jnp.sum(result, axis=1)


if __name__ == "__main__":
    # Small deterministic setup consistent with the module's __init__.
    B, S, D, H, Dh = 2, 8, 32, 4, 16   # batch, seq (<= n_ctx), d_model, heads, d_head

    key = jax.random.PRNGKey(0)
    kx, kq, kk, kv, ko, kx2 = jax.random.split(key, 6)

    scale = 1.0 / np.sqrt(D)
    x = jax.random.normal(kx, (B, S, D), dtype=jnp.float32)
    w_q = jax.random.normal(kq, (H, Dh, D), dtype=jnp.float32) * scale
    w_k = jax.random.normal(kk, (H, Dh, D), dtype=jnp.float32) * scale
    w_v = jax.random.normal(kv, (H, Dh, D), dtype=jnp.float32) * scale
    w_o = jax.random.normal(ko, (H, D, Dh), dtype=jnp.float32) * scale

    # --- f32 path ------------------------------------------------------------------
    ref = attention_reference(x, w_q, w_k, w_v, w_o)
    out = jax.block_until_ready(attention_forward(x, w_q, w_k, w_v, w_o))
    assert out.shape == (B, S, D)
    # Tolerance accounts for TPU default matmul precision (MXU rounds f32 operands
    # toward bf16 with f32 accumulation) on either side of the comparison.
    assert np.allclose(np.asarray(out), np.asarray(ref), atol=5e-2, rtol=5e-2), \
        float(np.max(np.abs(np.asarray(out) - np.asarray(ref))))

    # --- multi query-tile / multi key-tile path -------------------------------------
    # Exercises the @pl.when(qt==0) K/V cache gate and the causal key-tile fori_loop.
    S2 = 16
    x2 = jax.random.normal(kx2, (B, S2, D), dtype=jnp.float32)
    ref2 = attention_reference(x2, w_q, w_k, w_v, w_o)
    out2 = jax.block_until_ready(attention_forward(x2, w_q, w_k, w_v, w_o, tq=8))
    assert out2.shape == (B, S2, D)
    assert np.allclose(np.asarray(out2), np.asarray(ref2), atol=5e-2, rtol=5e-2), \
        float(np.max(np.abs(np.asarray(out2) - np.asarray(ref2))))

    # --- bf16 path (bf16 MXU operands, f32 accumulation / softmax) ------------------
    out_bf16 = jax.block_until_ready(
        attention_forward(x.astype(jnp.bfloat16), w_q, w_k, w_v, w_o))
    assert out_bf16.shape == (B, S, D)
    assert np.allclose(np.asarray(out_bf16, dtype=np.float32), np.asarray(ref),
                       atol=1.5e-1, rtol=1.5e-1)

    print("KERNEL_OK")
</pallas_src>

<mosaic_0001>
module attributes {stable_mosaic.version = 11 : i64} {
  func.func @_attn_kernel(%arg0: i32, %arg1: i32, %arg2: memref<1x8x32xf32, #tpu.memory_space<vmem>>, %arg3: memref<32x64xf32, #tpu.memory_space<vmem>>, %arg4: memref<32x64xf32, #tpu.memory_space<vmem>>, %arg5: memref<32x64xf32, #tpu.memory_space<vmem>>, %arg6: memref<64x32xf32, #tpu.memory_space<vmem>>, %arg7: memref<1x8x32xf32, #tpu.memory_space<vmem>>, %arg8: memref<8x64xf32, #tpu.memory_space<vmem>>, %arg9: memref<8x64xf32, #tpu.memory_space<vmem>>) attributes {dimension_semantics = [#tpu.dimension_semantics<parallel>, #tpu.dimension_semantics<arbitrary>], iteration_bounds = array<i64: 2, 1>, scalar_prefetch = 0 : i64, scratch_operands = 2 : i64, tpu.core_type = #tpu.core_type<tc>, window_params = [{transform_indices = @transform_0, window_bounds = array<i64: 1, 8, 32>}, {pipeline_mode = #tpu.pipeline_mode<synchronous>, transform_indices = @transform_1, window_bounds = array<i64: 32, 64>}, {pipeline_mode = #tpu.pipeline_mode<synchronous>, transform_indices = @transform_2, window_bounds = array<i64: 32, 64>}, {pipeline_mode = #tpu.pipeline_mode<synchronous>, transform_indices = @transform_3, window_bounds = array<i64: 32, 64>}, {pipeline_mode = #tpu.pipeline_mode<synchronous>, transform_indices = @transform_4, window_bounds = array<i64: 64, 32>}, {transform_indices = @transform_5, window_bounds = array<i64: 1, 8, 32>}]} {
    %c0_i32 = arith.constant 0 : i32
    %0 = arith.cmpi eq, %arg1, %c0_i32 : i32
    %1 = arith.extui %0 : i1 to i32
    %c0_i32_0 = arith.constant 0 : i32
    %2 = arith.cmpi ne, %1, %c0_i32_0 : i32
    scf.if %2 {
      %c0_39 = arith.constant 0 : index
      %c0_40 = arith.constant 0 : index
      %c0_41 = arith.constant 0 : index
      %61 = vector.load %arg2[%c0_39, %c0_40, %c0_41] : memref<1x8x32xf32, #tpu.memory_space<vmem>>, vector<1x8x32xf32>
      %62 = vector.shape_cast %61 : vector<1x8x32xf32> to vector<8x32xf32>
      %c0_42 = arith.constant 0 : index
      %c0_43 = arith.constant 0 : index
      %63 = vector.load %arg4[%c0_42, %c0_43] : memref<32x64xf32, #tpu.memory_space<vmem>>, vector<32x64xf32>
      %cst_44 = arith.constant dense<0.000000e+00> : vector<8x64xf32>
      %64 = tpu.matmul %62, %63, %cst_44 {dimension_numbers = #tpu.dot_dimension_numbers<[1], [0], [0], [1], [0, 0, 1, 1], [], []>} : vector<8x32xf32>, vector<32x64xf32>, vector<8x64xf32> -> vector<8x64xf32>
      %c0_45 = arith.constant 0 : index
      %c0_46 = arith.constant 0 : index
      %65 = vector.load %arg8[%c0_45, %c0_46] : memref<8x64xf32, #tpu.memory_space<vmem>>, vector<8x64xf32>
      tpu.vector_store %arg8[%c0_45, %c0_46], %64 {strides = array<i32>} : memref<8x64xf32, #tpu.memory_space<vmem>>, vector<8x64xf32>,
      %c0_47 = arith.constant 0 : index
      %c0_48 = arith.constant 0 : index
      %66 = vector.load %arg5[%c0_47, %c0_48] : memref<32x64xf32, #tpu.memory_space<vmem>>, vector<32x64xf32>
      %cst_49 = arith.constant dense<0.000000e+00> : vector<8x64xf32>
      %67 = tpu.matmul %62, %66, %cst_49 {dimension_numbers = #tpu.dot_dimension_numbers<[1], [0], [0], [1], [0, 0, 1, 1], [], []>} : vector<8x32xf32>, vector<32x64xf32>, vector<8x64xf32> -> vector<8x64xf32>
      %c0_50 = arith.constant 0 : index
      %c0_51 = arith.constant 0 : index
      %68 = vector.load %arg9[%c0_50, %c0_51] : memref<8x64xf32, #tpu.memory_space<vmem>>, vector<8x64xf32>
      tpu.vector_store %arg9[%c0_50, %c0_51], %67 {strides = array<i32>} : memref<8x64xf32, #tpu.memory_space<vmem>>, vector<8x64xf32>,
    } else {
    }
    %c8_i32 = arith.constant 8 : i32
    %3 = arith.muli %arg1, %c8_i32 : i32
    %4 = tpu.assume_multiple %3, 8 : i32
    %c0 = arith.constant 0 : index
    %c0_1 = arith.constant 0 : index
    %c0_2 = arith.constant 0 : index
    %5 = vector.load %arg2[%c0, %c0_1, %c0_2] : memref<1x8x32xf32, #tpu.memory_space<vmem>>, vector<1x8x32xf32>
    %6 = vector.shape_cast %5 : vector<1x8x32xf32> to vector<8x32xf32>
    %c0_3 = arith.constant 0 : index
    %c0_4 = arith.constant 0 : index
    %7 = vector.load %arg3[%c0_3, %c0_4] : memref<32x64xf32, #tpu.memory_space<vmem>>, vector<32x64xf32>
    %cst = arith.constant dense<0.000000e+00> : vector<8x64xf32>
    %8 = tpu.matmul %6, %7, %cst {dimension_numbers = #tpu.dot_dimension_numbers<[1], [0], [0], [1], [0, 0, 1, 1], [], []>} : vector<8x32xf32>, vector<32x64xf32>, vector<8x64xf32> -> vector<8x64xf32>
    %cst_5 = arith.constant 2.500000e-01 : f32
    %9 = vector.broadcast %cst_5 : f32 to vector<8x64xf32>
    %10 = arith.mulf %8, %9 : vector<8x64xf32>
    %11 = tpu.iota {dimensions = array<i32: 0>} : vector<8x8xi32>
    %12 = vector.broadcast %4 : i32 to vector<8x8xi32>
    %13 = arith.addi %12, %11 : vector<8x8xi32>
    %14 = tpu.iota {dimensions = array<i32: 1>} : vector<8x8xi32>
    %15 = vector.extract_strided_slice %10 {offsets = [0, 0], sizes = [8, 16], strides = [1, 1]} : vector<8x64xf32> to vector<8x16xf32>
    %cst_6 = arith.constant -1.000000e+30 : f32
    %16 = vector.broadcast %cst_6 : f32 to vector<8x1xf32>
    %cst_7 = arith.constant 0.000000e+00 : f32
    %17 = vector.broadcast %cst_7 : f32 to vector<8x1xf32>
    %cst_8 = arith.constant 0.000000e+00 : f32
    %18 = vector.broadcast %cst_8 : f32 to vector<8x16xf32>
    %c1_i32 = arith.constant 1 : i32
    %19 = arith.addi %arg1, %c1_i32 : i32
    %cst_9 = arith.constant -1.000000e+30 : f32
    %c0_i32_10 = arith.constant 0 : i32
    %20 = arith.subi %19, %c0_i32_10 : i32
    %21 = arith.addi %c0_i32_10, %20 : i32
    %c1_i32_11 = arith.constant 1 : i32
    %22:3 = scf.for %arg10 = %c0_i32_10 to %21 step %c1_i32_11 iter_args(%arg11 = %16, %arg12 = %17, %arg13 = %18) -> (vector<8x1xf32>, vector<8x1xf32>, vector<8x16xf32>)  : i32 {
      %c8_i32_39 = arith.constant 8 : i32
      %61 = arith.muli %arg10, %c8_i32_39 : i32
      %62 = tpu.assume_multiple %61, 8 : i32
      %63 = arith.index_cast %62 : i32 to index
      %c0_40 = arith.constant 0 : index
      %64 = vector.load %arg8[%63, %c0_40] : memref<8x64xf32, #tpu.memory_space<vmem>>, vector<8x16xf32>
      %65 = arith.index_cast %62 : i32 to index
      %c0_41 = arith.constant 0 : index
      %66 = vector.load %arg9[%65, %c0_41] : memref<8x64xf32, #tpu.memory_space<vmem>>, vector<8x16xf32>
      %cst_42 = arith.constant dense<0.000000e+00> : vector<8x8xf32>
      %67 = tpu.matmul %15, %64, %cst_42 {dimension_numbers = #tpu.dot_dimension_numbers<[1], [1], [0], [0], [0, 0, 1, 0], [], []>} : vector<8x16xf32>, vector<8x16xf32>, vector<8x8xf32> -> vector<8x8xf32>
      %68 = vector.broadcast %62 : i32 to vector<8x8xi32>
      %69 = arith.addi %68, %14 : vector<8x8xi32>
      %70 = arith.cmpi sle, %69, %13 : vector<8x8xi32>
      %71 = vector.broadcast %cst_9 : f32 to vector<8x8xf32>
      %72 = arith.select %70, %67, %71 : vector<8x8xi1>, vector<8x8xf32>
      %cst_43 = arith.constant dense<0xFF800000> : vector<8xf32>
      %73 = vector.multi_reduction <maximumf>, %72, %cst_43 [1] : vector<8x8xf32> to vector<8xf32>
      %74 = vector.shape_cast %73 : vector<8xf32> to vector<8x1xf32>
      %75 = arith.maximumf %arg11, %74 : vector<8x1xf32>
      %76 = arith.subf %arg11, %75 : vector<8x1xf32>
      %77 = math.exp %76 : vector<8x1xf32>
      %78 = vector.broadcast %75 : vector<8x1xf32> to vector<8x8xf32>
      %79 = arith.subf %72, %78 : vector<8x8xf32>
      %80 = math.exp %79 : vector<8x8xf32>
      %81 = arith.mulf %77, %arg12 : vector<8x1xf32>
      %cst_44 = arith.constant dense<0.000000e+00> : vector<8xf32>
      %82 = vector.multi_reduction <add>, %80, %cst_44 [1] : vector<8x8xf32> to vector<8xf32>
      %83 = vector.shape_cast %82 : vector<8xf32> to vector<8x1xf32>
      %84 = arith.addf %81, %83 : vector<8x1xf32>
      %85 = vector.broadcast %77 : vector<8x1xf32> to vector<8x16xf32>
      %86 = arith.mulf %85, %arg13 : vector<8x16xf32>
      %cst_45 = arith.constant dense<0.000000e+00> : vector<8x16xf32>
      %87 = tpu.matmul %80, %66, %cst_45 {dimension_numbers = #tpu.dot_dimension_numbers<[1], [0], [0], [1], [0, 0, 1, 1], [], []>} : vector<8x8xf32>, vector<8x16xf32>, vector<8x16xf32> -> vector<8x16xf32>
      %88 = arith.addf %86, %87 : vector<8x16xf32>
      scf.yield %75, %84, %88 : vector<8x1xf32>, vector<8x1xf32>, vector<8x16xf32>
    }
    %23 = vector.broadcast %22#1 : vector<8x1xf32> to vector<8x16xf32>
    %24 = arith.divf %22#2, %23 : vector<8x16xf32>
    %25 = vector.extract_strided_slice %10 {offsets = [0, 16], sizes = [8, 16], strides = [1, 1]} : vector<8x64xf32> to vector<8x16xf32>
    %cst_12 = arith.constant -1.000000e+30 : f32
    %26 = vector.broadcast %cst_12 : f32 to vector<8x1xf32>
    %cst_13 = arith.constant 0.000000e+00 : f32
    %27 = vector.broadcast %cst_13 : f32 to vector<8x1xf32>
    %cst_14 = arith.constant 0.000000e+00 : f32
    %28 = vector.broadcast %cst_14 : f32 to vector<8x16xf32>
    %c1_i32_15 = arith.constant 1 : i32
    %29 = arith.addi %arg1, %c1_i32_15 : i32
    %cst_16 = arith.constant -1.000000e+30 : f32
    %c0_i32_17 = arith.constant 0 : i32
    %30 = arith.subi %29, %c0_i32_17 : i32
    %31 = arith.addi %c0_i32_17, %30 : i32
    %c1_i32_18 = arith.constant 1 : i32
    %32:3 = scf.for %arg10 = %c0_i32_17 to %31 step %c1_i32_18 iter_args(%arg11 = %26, %arg12 = %27, %arg13 = %28) -> (vector<8x1xf32>, vector<8x1xf32>, vector<8x16xf32>)  : i32 {
      %c8_i32_39 = arith.constant 8 : i32
      %61 = arith.muli %arg10, %c8_i32_39 : i32
      %62 = tpu.assume_multiple %61, 8 : i32
      %63 = arith.index_cast %62 : i32 to index
      %c16 = arith.constant 16 : index
      %64 = vector.load %arg8[%63, %c16] : memref<8x64xf32, #tpu.memory_space<vmem>>, vector<8x16xf32>
      %65 = arith.index_cast %62 : i32 to index
      %c16_40 = arith.constant 16 : index
      %66 = vector.load %arg9[%65, %c16_40] : memref<8x64xf32, #tpu.memory_space<vmem>>, vector<8x16xf32>
      %cst_41 = arith.constant dense<0.000000e+00> : vector<8x8xf32>
      %67 = tpu.matmul %25, %64, %cst_41 {dimension_numbers = #tpu.dot_dimension_numbers<[1], [1], [0], [0], [0, 0, 1, 0], [], []>} : vector<8x16xf32>, vector<8x16xf32>, vector<8x8xf32> -> vector<8x8xf32>
      %68 = vector.broadcast %62 : i32 to vector<8x8xi32>
      %69 = arith.addi %68, %14 : vector<8x8xi32>
      %70 = arith.cmpi sle, %69, %13 : vector<8x8xi32>
      %71 = vector.broadcast %cst_16 : f32 to vector<8x8xf32>
      %72 = arith.select %70, %67, %71 : vector<8x8xi1>, vector<8x8xf32>
      %cst_42 = arith.constant dense<0xFF800000> : vector<8xf32>
      %73 = vector.multi_reduction <maximumf>, %72, %cst_42 [1] : vector<8x8xf32> to vector<8xf32>
      %74 = vector.shape_cast %73 : vector<8xf32> to vector<8x1xf32>
      %75 = arith.maximumf %arg11, %74 : vector<8x1xf32>
      %76 = arith.subf %arg11, %75 : vector<8x1xf32>
      %77 = math.exp %76 : vector<8x1xf32>
      %78 = vector.broadcast %75 : vector<8x1xf32> to vector<8x8xf32>
      %79 = arith.subf %72, %78 : vector<8x8xf32>
      %80 = math.exp %79 : vector<8x8xf32>
      %81 = arith.mulf %77, %arg12 : vector<8x1xf32>
      %cst_43 = arith.constant dense<0.000000e+00> : vector<8xf32>
      %82 = vector.multi_reduction <add>, %80, %cst_43 [1] : vector<8x8xf32> to vector<8xf32>
      %83 = vector.shape_cast %82 : vector<8xf32> to vector<8x1xf32>
      %84 = arith.addf %81, %83 : vector<8x1xf32>
      %85 = vector.broadcast %77 : vector<8x1xf32> to vector<8x16xf32>
      %86 = arith.mulf %85, %arg13 : vector<8x16xf32>
      %cst_44 = arith.constant dense<0.000000e+00> : vector<8x16xf32>
      %87 = tpu.matmul %80, %66, %cst_44 {dimension_numbers = #tpu.dot_dimension_numbers<[1], [0], [0], [1], [0, 0, 1, 1], [], []>} : vector<8x8xf32>, vector<8x16xf32>, vector<8x16xf32> -> vector<8x16xf32>
      %88 = arith.addf %86, %87 : vector<8x16xf32>
      scf.yield %75, %84, %88 : vector<8x1xf32>, vector<8x1xf32>, vector<8x16xf32>
    }
    %33 = vector.broadcast %32#1 : vector<8x1xf32> to vector<8x16xf32>
    %34 = arith.divf %32#2, %33 : vector<8x16xf32>
    %35 = vector.extract_strided_slice %10 {offsets = [0, 32], sizes = [8, 16], strides = [1, 1]} : vector<8x64xf32> to vector<8x16xf32>
    %cst_19 = arith.constant -1.000000e+30 : f32
    %36 = vector.broadcast %cst_19 : f32 to vector<8x1xf32>
    %cst_20 = arith.constant 0.000000e+00 : f32
    %37 = vector.broadcast %cst_20 : f32 to vector<8x1xf32>
    %cst_21 = arith.constant 0.000000e+00 : f32
    %38 = vector.broadcast %cst_21 : f32 to vector<8x16xf32>
    %c1_i32_22 = arith.constant 1 : i32
    %39 = arith.addi %arg1, %c1_i32_22 : i32
    %cst_23 = arith.constant -1.000000e+30 : f32
    %c0_i32_24 = arith.constant 0 : i32
    %40 = arith.subi %39, %c0_i32_24 : i32
    %41 = arith.addi %c0_i32_24, %40 : i32
    %c1_i32_25 = arith.constant 1 : i32
    %42:3 = scf.for %arg10 = %c0_i32_24 to %41 step %c1_i32_25 iter_args(%arg11 = %36, %arg12 = %37, %arg13 = %38) -> (vector<8x1xf32>, vector<8x1xf32>, vector<8x16xf32>)  : i32 {
      %c8_i32_39 = arith.constant 8 : i32
      %61 = arith.muli %arg10, %c8_i32_39 : i32
      %62 = tpu.assume_multiple %61, 8 : i32
      %63 = arith.index_cast %62 : i32 to index
      %c32 = arith.constant 32 : index
      %64 = vector.load %arg8[%63, %c32] : memref<8x64xf32, #tpu.memory_space<vmem>>, vector<8x16xf32>
      %65 = arith.index_cast %62 : i32 to index
      %c32_40 = arith.constant 32 : index
      %66 = vector.load %arg9[%65, %c32_40] : memref<8x64xf32, #tpu.memory_space<vmem>>, vector<8x16xf32>
      %cst_41 = arith.constant dense<0.000000e+00> : vector<8x8xf32>
      %67 = tpu.matmul %35, %64, %cst_41 {dimension_numbers = #tpu.dot_dimension_numbers<[1], [1], [0], [0], [0, 0, 1, 0], [], []>} : vector<8x16xf32>, vector<8x16xf32>, vector<8x8xf32> -> vector<8x8xf32>
      %68 = vector.broadcast %62 : i32 to vector<8x8xi32>
      %69 = arith.addi %68, %14 : vector<8x8xi32>
      %70 = arith.cmpi sle, %69, %13 : vector<8x8xi32>
      %71 = vector.broadcast %cst_23 : f32 to vector<8x8xf32>
      %72 = arith.select %70, %67, %71 : vector<8x8xi1>, vector<8x8xf32>
      %cst_42 = arith.constant dense<0xFF800000> : vector<8xf32>
      %73 = vector.multi_reduction <maximumf>, %72, %cst_42 [1] : vector<8x8xf32> to vector<8xf32>
      %74 = vector.shape_cast %73 : vector<8xf32> to vector<8x1xf32>
      %75 = arith.maximumf %arg11, %74 : vector<8x1xf32>
      %76 = arith.subf %arg11, %75 : vector<8x1xf32>
      %77 = math.exp %76 : vector<8x1xf32>
      %78 = vector.broadcast %75 : vector<8x1xf32> to vector<8x8xf32>
      %79 = arith.subf %72, %78 : vector<8x8xf32>
      %80 = math.exp %79 : vector<8x8xf32>
      %81 = arith.mulf %77, %arg12 : vector<8x1xf32>
      %cst_43 = arith.constant dense<0.000000e+00> : vector<8xf32>
      %82 = vector.multi_reduction <add>, %80, %cst_43 [1] : vector<8x8xf32> to vector<8xf32>
      %83 = vector.shape_cast %82 : vector<8xf32> to vector<8x1xf32>
      %84 = arith.addf %81, %83 : vector<8x1xf32>
      %85 = vector.broadcast %77 : vector<8x1xf32> to vector<8x16xf32>
      %86 = arith.mulf %85, %arg13 : vector<8x16xf32>
      %cst_44 = arith.constant dense<0.000000e+00> : vector<8x16xf32>
      %87 = tpu.matmul %80, %66, %cst_44 {dimension_numbers = #tpu.dot_dimension_numbers<[1], [0], [0], [1], [0, 0, 1, 1], [], []>} : vector<8x8xf32>, vector<8x16xf32>, vector<8x16xf32> -> vector<8x16xf32>
      %88 = arith.addf %86, %87 : vector<8x16xf32>
      scf.yield %75, %84, %88 : vector<8x1xf32>, vector<8x1xf32>, vector<8x16xf32>
    }
    %43 = vector.broadcast %42#1 : vector<8x1xf32> to vector<8x16xf32>
    %44 = arith.divf %42#2, %43 : vector<8x16xf32>
    %45 = vector.extract_strided_slice %10 {offsets = [0, 48], sizes = [8, 16], strides = [1, 1]} : vector<8x64xf32> to vector<8x16xf32>
    %cst_26 = arith.constant -1.000000e+30 : f32
    %46 = vector.broadcast %cst_26 : f32 to vector<8x1xf32>
    %cst_27 = arith.constant 0.000000e+00 : f32
    %47 = vector.broadcast %cst_27 : f32 to vector<8x1xf32>
    %cst_28 = arith.constant 0.000000e+00 : f32
    %48 = vector.broadcast %cst_28 : f32 to vector<8x16xf32>
    %c1_i32_29 = arith.constant 1 : i32
    %49 = arith.addi %arg1, %c1_i32_29 : i32
    %cst_30 = arith.constant -1.000000e+30 : f32
    %c0_i32_31 = arith.constant 0 : i32
    %50 = arith.subi %49, %c0_i32_31 : i32
    %51 = arith.addi %c0_i32_31, %50 : i32
    %c1_i32_32 = arith.constant 1 : i32
    %52:3 = scf.for %arg10 = %c0_i32_31 to %51 step %c1_i32_32 iter_args(%arg11 = %46, %arg12 = %47, %arg13 = %48) -> (vector<8x1xf32>, vector<8x1xf32>, vector<8x16xf32>)  : i32 {
      %c8_i32_39 = arith.constant 8 : i32
      %61 = arith.muli %arg10, %c8_i32_39 : i32
      %62 = tpu.assume_multiple %61, 8 : i32
      %63 = arith.index_cast %62 : i32 to index
      %c48 = arith.constant 48 : index
      %64 = vector.load %arg8[%63, %c48] : memref<8x64xf32, #tpu.memory_space<vmem>>, vector<8x16xf32>
      %65 = arith.index_cast %62 : i32 to index
      %c48_40 = arith.constant 48 : index
      %66 = vector.load %arg9[%65, %c48_40] : memref<8x64xf32, #tpu.memory_space<vmem>>, vector<8x16xf32>
      %cst_41 = arith.constant dense<0.000000e+00> : vector<8x8xf32>
      %67 = tpu.matmul %45, %64, %cst_41 {dimension_numbers = #tpu.dot_dimension_numbers<[1], [1], [0], [0], [0, 0, 1, 0], [], []>} : vector<8x16xf32>, vector<8x16xf32>, vector<8x8xf32> -> vector<8x8xf32>
      %68 = vector.broadcast %62 : i32 to vector<8x8xi32>
      %69 = arith.addi %68, %14 : vector<8x8xi32>
      %70 = arith.cmpi sle, %69, %13 : vector<8x8xi32>
      %71 = vector.broadcast %cst_30 : f32 to vector<8x8xf32>
      %72 = arith.select %70, %67, %71 : vector<8x8xi1>, vector<8x8xf32>
      %cst_42 = arith.constant dense<0xFF800000> : vector<8xf32>
      %73 = vector.multi_reduction <maximumf>, %72, %cst_42 [1] : vector<8x8xf32> to vector<8xf32>
      %74 = vector.shape_cast %73 : vector<8xf32> to vector<8x1xf32>
      %75 = arith.maximumf %arg11, %74 : vector<8x1xf32>
      %76 = arith.subf %arg11, %75 : vector<8x1xf32>
      %77 = math.exp %76 : vector<8x1xf32>
      %78 = vector.broadcast %75 : vector<8x1xf32> to vector<8x8xf32>
      %79 = arith.subf %72, %78 : vector<8x8xf32>
      %80 = math.exp %79 : vector<8x8xf32>
      %81 = arith.mulf %77, %arg12 : vector<8x1xf32>
      %cst_43 = arith.constant dense<0.000000e+00> : vector<8xf32>
      %82 = vector.multi_reduction <add>, %80, %cst_43 [1] : vector<8x8xf32> to vector<8xf32>
      %83 = vector.shape_cast %82 : vector<8xf32> to vector<8x1xf32>
      %84 = arith.addf %81, %83 : vector<8x1xf32>
      %85 = vector.broadcast %77 : vector<8x1xf32> to vector<8x16xf32>
      %86 = arith.mulf %85, %arg13 : vector<8x16xf32>
      %cst_44 = arith.constant dense<0.000000e+00> : vector<8x16xf32>
      %87 = tpu.matmul %80, %66, %cst_44 {dimension_numbers = #tpu.dot_dimension_numbers<[1], [0], [0], [1], [0, 0, 1, 1], [], []>} : vector<8x8xf32>, vector<8x16xf32>, vector<8x16xf32> -> vector<8x16xf32>
      %88 = arith.addf %86, %87 : vector<8x16xf32>
      scf.yield %75, %84, %88 : vector<8x1xf32>, vector<8x1xf32>, vector<8x16xf32>
    }
    %53 = vector.broadcast %52#1 : vector<8x1xf32> to vector<8x16xf32>
    %54 = arith.divf %52#2, %53 : vector<8x16xf32>
    %55 = tpu.concatenate %24, %34, %44, %54 in 1 : vector<8x16xf32>, vector<8x16xf32>, vector<8x16xf32>, vector<8x16xf32> -> vector<8x64xf32>
    %c0_33 = arith.constant 0 : index
    %c0_34 = arith.constant 0 : index
    %56 = vector.load %arg6[%c0_33, %c0_34] : memref<64x32xf32, #tpu.memory_space<vmem>>, vector<64x32xf32>
    %cst_35 = arith.constant dense<0.000000e+00> : vector<8x32xf32>
    %57 = tpu.matmul %55, %56, %cst_35 {dimension_numbers = #tpu.dot_dimension_numbers<[1], [0], [0], [1], [0, 0, 1, 1], [], []>} : vector<8x64xf32>, vector<64x32xf32>, vector<8x32xf32> -> vector<8x32xf32>
    %c0_36 = arith.constant 0 : index
    %c0_37 = arith.constant 0 : index
    %c0_38 = arith.constant 0 : index
    %58 = vector.load %arg7[%c0_36, %c0_37, %c0_38] : memref<1x8x32xf32, #tpu.memory_space<vmem>>, vector<1x8x32xf32>
    %59 = vector.shape_cast %58 : vector<1x8x32xf32> to vector<8x32xf32>
    %60 = vector.shape_cast %57 : vector<8x32xf32> to vector<1x8x32xf32>
    tpu.vector_store %arg7[%c0_36, %c0_37, %c0_38], %60 {strides = array<i32>} : memref<1x8x32xf32, #tpu.memory_space<vmem>>, vector<1x8x32xf32>,
    return
  }
  func.func @transform_0(%arg0: i32, %arg1: i32) -> (i32, i32, i32) {
    %c0_i32 = arith.constant 0 : i32
    %c0_i32_0 = arith.constant 0 : i32
    %c0_i32_1 = arith.constant 0 : i32
    return %arg0, %c0_i32, %c0_i32_0 : i32, i32, i32
  }
  func.func @transform_1(%arg0: i32, %arg1: i32) -> (i32, i32) {
    %c0_i32 = arith.constant 0 : i32
    %c0_i32_0 = arith.constant 0 : i32
    %c0_i32_1 = arith.constant 0 : i32
    return %c0_i32, %c0_i32_0 : i32, i32
  }
  func.func @transform_2(%arg0: i32, %arg1: i32) -> (i32, i32) {
    %c0_i32 = arith.constant 0 : i32
    %c0_i32_0 = arith.constant 0 : i32
    %c0_i32_1 = arith.constant 0 : i32
    return %c0_i32, %c0_i32_0 : i32, i32
  }
  func.func @transform_3(%arg0: i32, %arg1: i32) -> (i32, i32) {
    %c0_i32 = arith.constant 0 : i32
    %c0_i32_0 = arith.constant 0 : i32
    %c0_i32_1 = arith.constant 0 : i32
    return %c0_i32, %c0_i32_0 : i32, i32
  }
  func.func @transform_4(%arg0: i32, %arg1: i32) -> (i32, i32) {
    %c0_i32 = arith.constant 0 : i32
    %c0_i32_0 = arith.constant 0 : i32
    %c0_i32_1 = arith.constant 0 : i32
    return %c0_i32, %c0_i32_0 : i32, i32
  }
  func.func @transform_5(%arg0: i32, %arg1: i32) -> (i32, i32, i32) {
    %c0_i32 = arith.constant 0 : i32
    %c0_i32_0 = arith.constant 0 : i32
    return %arg0, %arg1, %c0_i32 : i32, i32, i32
  }
}

</mosaic_0001>

<llo_original>
// kernel: tpu_custom_call.1
$region0: #{tpu_custom_call.1}
  #allocation0 [shape = 'u32[]', space=smem, size = 0x4, offset = 0x4, fixed_abs, tag = 'smem constant byte address 0x4 - core index']
  #allocation1 [shape = 'u32[144,128]{1,0:T(1,128)}', space=vmem, size = 0x12000, scoped, tag = 'internal scratch']
  #allocation2 [shape = 'f32[8,64]{1,0:T(8,128)}', space=vmem, size = 0x1000, scoped, tag = 'scratch operand']
  #allocation3 [shape = 'f32[8,64]{1,0:T(8,128)}', space=vmem, size = 0x1000, scoped, tag = 'scratch operand']
  %s0 = inlined_call_operand.hbm [shape: f32[2,8,32], index: 0, kind: input, shape index: {}]
  %s1 = inlined_call_operand.vmem [shape: f32[32,64], index: 1, kind: input, shape index: {}]
  %s2 = inlined_call_operand.vmem [shape: f32[32,64], index: 2, kind: input, shape index: {}]
  %s3 = inlined_call_operand.vmem [shape: f32[32,64], index: 3, kind: input, shape index: {}]
  %s4 = inlined_call_operand.vmem [shape: f32[64,32], index: 4, kind: input, shape index: {}]
  %s5 = inlined_call_operand.hbm [shape: f32[2,8,32], index: 5, kind: output, shape index: {}]
  %s6 = sld [smem:[#allocation0]]
  $region89: #{tpu_custom_call.1} parent=0
    _
  %s8 = ssub.s32 1, %s6
  %s9 = scalar_select 0, %s8, %s6
  $region1: #{tpu_custom_call.1} parent=0
    #allocation4 [shape = 'u8[8192]{0}', space=vmem, size = 0x2000, scoped, tag = 'input window, operand 0']
    #allocation5 [shape = 's32[2]{0}', space=sflag, size = 0x8, scoped, tag = 'scoped memory for tpu_custom_call.1']
    #allocation6 [shape = 's32[2]{0}', space=sflag, size = 0x8, scoped, tag = 'scoped memory for tpu_custom_call.1']
    #allocation7 [shape = 'u8[8192]{0}', space=vmem, size = 0x2000, scoped, tag = 'output window, operand 0']
    %10 = vsyncpa [#allocation5], 0
    %s11 = scalar_lea.sflag [#allocation5], 1
    %12 = vsyncpa %s11, 0
    %13 = vsyncpa [#allocation6], 0
    %s14 = scalar_lea.sflag [#allocation6], 1
    %15 = vsyncpa %s14, 0
    loop: start=0, step=1, limit=4
    $region2: #{tpu_custom_call.1} parent=1 // loop_pre_header
      _
    $region3: #{tpu_custom_call.1} parent=1 // loop_header
      %s17 = sphi 0, %s21
      %p18 = scmp.ge.s32.totalorder %s17, 4
      %s24 = sphi 0, %s36
      %s25 = sphi 0, %s32
      %s26 = sphi 0, %s24
      %s27 = sphi 0, %s25
      %s28 = sphi 0, %s26
      %s29 = sphi 0, %s27
      %s39 = sphi 0, %s41
      %s42 = sphi 0, %s39
      %s43 = sphi 0, %s42
      %s59 = sphi 0, %s43
      %s63 = sphi 0, %s63
      %s65 = sphi 0, %s63
      %s66 = sphi 0, %s65
      %s80 = sphi 0, %s66
      %s84 = sphi 0, %s84
      %s86 = sphi 0, %s84
      %s87 = sphi 0, %s86
      %s101 = sphi 0, %s87
      %s105 = sphi 0, %s105
      %s107 = sphi 0, %s105
      %s108 = sphi 0, %s107
      %s122 = sphi 0, %s108
      %s126 = sphi 0, %s126
      %s128 = sphi 0, %s126
      %s129 = sphi 0, %s128
      %s143 = sphi 0, %s129
      %s151 = sphi 0, %s153
      %s154 = sphi 0, %s151
      %s155 = sphi 0, %s154
      %s171 = sphi 0, %s155
    $region4: #{tpu_custom_call.1} parent=1 // loop_header_branch
      %20 = sbr.rel (%p18) target = $region8
    $region5: #{tpu_custom_call.1} parent=1 // loop_body
      %s22 = ssub.s32 %s17, 1
      %s23 = ssub.s32 %s17, 2
      %s30 = sadd.s32 1, %s25
      %p31 = scmp.ge.s32.totalorder %s30, 1
      %s32 = scalar_select %p31, 0, %s30
      %s33 = sadd.s32 1, %s24
      %s34 = scalar_select %p31, %s33, %s24
      %p35 = scmp.ge.s32.totalorder %s34, 2
      %s36 = scalar_select %p35, 0, %s34
      %s37 = ssub.s32 %s24, %s36
      %p38 = scmp.eq.s32.totalorder %s37, 0
      %s40 = sadd.s32 %s39, 1
      %s41 = scalar_select %p38, %s39, %s40
      %p44 = pneg %p38
      %p45 = scmp.eq.s32.totalorder %s17, 1
      %p46 = por %p44, %p45
      %p47 = scmp.ne.s32.totalorder %s39, %s42
      %p48 = scmp.eq.s32.totalorder %s17, 0
      %p49 = por %p47, %p48
      %p50 = scmp.ne.s32.totalorder %s39, %s42
      %p51 = scmp.eq.s32.totalorder %s22, 1
      %p52 = por %p50, %p51
      %p53 = scmp.ne.s32.totalorder %s42, %s43
      %p54 = scmp.eq.s32.totalorder %s22, 0
      %p55 = por %p53, %p54
      %p56 = scmp.ne.s32.totalorder %s42, %s43
      %p57 = scmp.eq.s32.totalorder %s23, 1
      %p58 = por %p56, %p57
      %p60 = scmp.ne.s32.totalorder %s43, %s59
      %p61 = scmp.eq.s32.totalorder %s23, 0
      %p62 = por %p60, %p61
      %s64 = sadd.s32 %s63, 1
      %p67 = scmp.eq.s32.totalorder %s17, 1
      %p68 = scmp.ne.s32.totalorder %s63, %s65
      %p69 = scmp.eq.s32.totalorder %s17, 0
      %p70 = por %p68, %p69
      %p71 = scmp.ne.s32.totalorder %s63, %s65
      %p72 = scmp.eq.s32.totalorder %s22, 1
      %p73 = por %p71, %p72
      %p74 = scmp.ne.s32.totalorder %s65, %s66
      %p75 = scmp.eq.s32.totalorder %s22, 0
      %p76 = por %p74, %p75
      %p77 = scmp.ne.s32.totalorder %s65, %s66
      %p78 = scmp.eq.s32.totalorder %s23, 1
      %p79 = por %p77, %p78
      %p81 = scmp.ne.s32.totalorder %s66, %s80
      %p82 = scmp.eq.s32.totalorder %s23, 0
      %p83 = por %p81, %p82
      %s85 = sadd.s32 %s84, 1
      %p88 = scmp.eq.s32.totalorder %s17, 1
      %p89 = scmp.ne.s32.totalorder %s84, %s86
      %p90 = scmp.eq.s32.totalorder %s17, 0
      %p91 = por %p89, %p90
      %p92 = scmp.ne.s32.totalorder %s84, %s86
      %p93 = scmp.eq.s32.totalorder %s22, 1
      %p94 = por %p92, %p93
      %p95 = scmp.ne.s32.totalorder %s86, %s87
      %p96 = scmp.eq.s32.totalorder %s22, 0
      %p97 = por %p95, %p96
      %p98 = scmp.ne.s32.totalorder %s86, %s87
      %p99 = scmp.eq.s32.totalorder %s23, 1
      %p100 = por %p98, %p99
      %p102 = scmp.ne.s32.totalorder %s87, %s101
      %p103 = scmp.eq.s32.totalorder %s23, 0
      %p104 = por %p102, %p103
      %s106 = sadd.s32 %s105, 1
      %p109 = scmp.eq.s32.totalorder %s17, 1
      %p110 = scmp.ne.s32.totalorder %s105, %s107
      %p111 = scmp.eq.s32.totalorder %s17, 0
      %p112 = por %p110, %p111
      %p113 = scmp.ne.s32.totalorder %s105, %s107
      %p114 = scmp.eq.s32.totalorder %s22, 1
      %p115 = por %p113, %p114
      %p116 = scmp.ne.s32.totalorder %s107, %s108
      %p117 = scmp.eq.s32.totalorder %s22, 0
      %p118 = por %p116, %p117
      %p119 = scmp.ne.s32.totalorder %s107, %s108
      %p120 = scmp.eq.s32.totalorder %s23, 1
      %p121 = por %p119, %p120
      %p123 = scmp.ne.s32.totalorder %s108, %s122
      %p124 = scmp.eq.s32.totalorder %s23, 0
      %p125 = por %p123, %p124
      %s127 = sadd.s32 %s126, 1
      %p130 = scmp.eq.s32.totalorder %s17, 1
      %p131 = scmp.ne.s32.totalorder %s126, %s128
      %p132 = scmp.eq.s32.totalorder %s17, 0
      %p133 = por %p131, %p132
      %p134 = scmp.ne.s32.totalorder %s126, %s128
      %p135 = scmp.eq.s32.totalorder %s22, 1
      %p136 = por %p134, %p135
      %p137 = scmp.ne.s32.totalorder %s128, %s129
      %p138 = scmp.eq.s32.totalorder %s22, 0
      %p139 = por %p137, %p138
      %p140 = scmp.ne.s32.totalorder %s128, %s129
      %p141 = scmp.eq.s32.totalorder %s23, 1
      %p142 = por %p140, %p141
      %p144 = scmp.ne.s32.totalorder %s129, %s143
      %p145 = scmp.eq.s32.totalorder %s23, 0
      %p146 = por %p144, %p145
      %s147 = ssub.s32 %s24, %s36
      %s148 = ssub.s32 %s25, %s32
      %s149 = sor.u32 %s147, %s148
      %p150 = scmp.eq.s32.totalorder %s149, 0
      %s152 = sadd.s32 %s151, 1
      %s153 = scalar_select %p150, %s151, %s152
      %p156 = pneg %p150
      %p157 = scmp.eq.s32.totalorder %s17, 1
      %p158 = por %p156, %p157
      %p159 = scmp.ne.s32.totalorder %s151, %s154
      %p160 = scmp.eq.s32.totalorder %s17, 0
      %p161 = por %p159, %p160
      %p162 = scmp.ne.s32.totalorder %s151, %s154
      %p163 = scmp.eq.s32.totalorder %s22, 1
      %p164 = por %p162, %p163
      %p165 = scmp.ne.s32.totalorder %s154, %s155
      %p166 = scmp.eq.s32.totalorder %s22, 0
      %p167 = por %p165, %p166
      %p168 = scmp.ne.s32.totalorder %s154, %s155
      %p169 = scmp.eq.s32.totalorder %s23, 1
      %p170 = por %p168, %p169
      %p172 = scmp.ne.s32.totalorder %s155, %s171
      %p173 = scmp.eq.s32.totalorder %s23, 0
      %p174 = por %p172, %p173
      %p175 = scmp.le.s32.totalorder 1, %s17
      %p176 = scmp.lt.s32.totalorder %s17, 3
      %p177 = pnand %p175, %p176
      %p178 = pneg %p177
      // Predicated region
      $region9: #{tpu_custom_call.1} parent=5 // pred_check
        _
      $region10: #{tpu_custom_call.1} parent=5 // pred_check_branch
        %180 = sbr.rel (%p177) target = $region12
      $region11: #{tpu_custom_call.1} parent=5 // pred_region
        %s181 = ssub.s32 %s17, 1
        // Predicated region
        $region13: #{tpu_custom_call.1} parent=11 // pred_check
          %p182 = pneg %p76
        $region14: #{tpu_custom_call.1} parent=11 // pred_check_branch
          %184 = sbr.rel (%p182) target = $region16
        $region15: #{tpu_custom_call.1} parent=11 // pred_region
          _
        $region16: #{tpu_custom_call.1} parent=11 // pred_fallthru
          _
        // Predicated region
        $region17: #{tpu_custom_call.1} parent=11 // pred_check
          %p185 = pneg %p97
        $region18: #{tpu_custom_call.1} parent=11 // pred_check_branch
          %187 = sbr.rel (%p185) target = $region20
        $region19: #{tpu_custom_call.1} parent=11 // pred_region
          _
        $region20: #{tpu_custom_call.1} parent=11 // pred_fallthru
          _
        // Predicated region
        $region21: #{tpu_custom_call.1} parent=11 // pred_check
          %p188 = pneg %p118
        $region22: #{tpu_custom_call.1} parent=11 // pred_check_branch
          %190 = sbr.rel (%p188) target = $region24
        $region23: #{tpu_custom_call.1} parent=11 // pred_region
          _
        $region24: #{tpu_custom_call.1} parent=11 // pred_fallthru
          _
        // Predicated region
        $region25: #{tpu_custom_call.1} parent=11 // pred_check
          %p191 = pneg %p139
        $region26: #{tpu_custom_call.1} parent=11 // pred_check_branch
          %193 = sbr.rel (%p191) target = $region28
        $region27: #{tpu_custom_call.1} parent=11 // pred_region
          _
        $region28: #{tpu_custom_call.1} parent=11 // pred_fallthru
          _
      $region12: #{tpu_custom_call.1} parent=5 // pred_fallthru
        _
      %p194 = scmp.lt.s32.totalorder %s17, 2
      // Predicated region
      $region29: #{tpu_custom_call.1} parent=5 // pred_check
        %p195 = pneg %p194
      $region30: #{tpu_custom_call.1} parent=5 // pred_check_branch
        %197 = sbr.rel (%p195) target = $region32
      $region31: #{tpu_custom_call.1} parent=5 // pred_region
        // Predicated region
        $region33: #{tpu_custom_call.1} parent=31 // pred_check
          %p198 = pneg %p49
        $region34: #{tpu_custom_call.1} parent=31 // pred_check_branch
          %200 = sbr.rel (%p198) target = $region36
        $region35: #{tpu_custom_call.1} parent=31 // pred_region
          %s201 = sand.u32 %s39, 1
          %s202 = scalar_lea.sflag [#allocation5], %s201
          %s203 = sand.u32 %s39, 1
          %s204 = smul.addr %s203, 8
          %s205 = scalar_lea.vmem [#allocation4], %s204
          %s207 = ssub.s32 128, 128
          %208 = vsyncadd %s202, %s207
          %s209 = smul.addr %s24, 128
          %s210 = scalar_lea.hbm %s0, %s209
          %s212 = sshll.u32 %s205, 4
          %s213 = int_to_ptr.vmem [resolvable:$true] %s212
          %215 = dma.hbm_to_vmem [thread:$0]  %s210, 128, %s213, %s202
        $region36: #{tpu_custom_call.1} parent=31 // pred_fallthru
          _
      $region32: #{tpu_custom_call.1} parent=5 // pred_fallthru
        _
      %p216 = scmp.le.s32.totalorder 1, %s17
      %p217 = scmp.lt.s32.totalorder %s17, 3
      %p218 = pnand %p216, %p217
      %p219 = pneg %p218
      // Predicated region
      $region37: #{tpu_custom_call.1} parent=5 // pred_check
        _
      $region38: #{tpu_custom_call.1} parent=5 // pred_check_branch
        %221 = sbr.rel (%p218) target = $region40
      $region39: #{tpu_custom_call.1} parent=5 // pred_region
        %s222 = ssub.s32 %s17, 1
        %s223 = sand.u32 %s42, 1
        %s224 = scalar_lea.sflag [#allocation5], %s223
        %s225 = sand.u32 %s42, 1
        %s226 = smul.addr %s225, 8
        %s227 = scalar_lea.vmem [#allocation4], %s226
        // Predicated region
        $region41: #{tpu_custom_call.1} parent=39 // pred_check
          %p228 = pneg %p55
        $region42: #{tpu_custom_call.1} parent=39 // pred_check_branch
          %230 = sbr.rel (%p228) target = $region44
        $region43: #{tpu_custom_call.1} parent=39 // pred_region
          %231 = dma.done %s224, 128
        $region44: #{tpu_custom_call.1} parent=39 // pred_fallthru
          _
        %s232 = sand.u32 %s42, 1
        %s233 = scalar_lea.sflag [#allocation5], %s232
        %s234 = sand.u32 %s42, 1
        %s235 = smul.addr %s234, 8
        %s236 = scalar_lea.vmem [#allocation4], %s235
        %p237 = pneg %p55
        %p238 = pneg %p52
        %p239 = pneg %p76
        %p240 = pneg %p73
        %p241 = pneg %p97
        %p242 = pneg %p94
        %p243 = pneg %p118
        %p244 = pneg %p115
        %p245 = pneg %p139
        %p246 = pneg %p136
        %p247 = pneg %p167
        %p248 = pneg %p164
        %s249 = sand.u32 %s154, 1
        %s250 = scalar_lea.sflag [#allocation6], %s249
        %s251 = sand.u32 %s154, 1
        %s252 = smul.addr %s251, 8
        %s253 = scalar_lea.vmem [#allocation7], %s252
        %p254 = scmp.eq.s32.totalorder %s27, 0
        // Predicated region
        $region45: #{tpu_custom_call.1} parent=39 // pred_check
          %p255 = pneg %p254
        $region46: #{tpu_custom_call.1} parent=39 // pred_check_branch
          %257 = sbr.rel (%p255) target = $region48
        $region47: #{tpu_custom_call.1} parent=39 // pred_region
          %v258 = vld [vmem:[%s227] sm:$0xff]
          %v259 = vld [vmem:[%s2] sm:$0xff]
          %v260 = vld [vmem:[%s2 + $0x8] sm:$0xff]
          %v261 = vld [vmem:[%s2 + $0x10] sm:$0xff]
          %v262 = vld [vmem:[%s2 + $0x18] sm:$0xff]
          %vm263 = vcmask 261120
          %v265 = vsel %vm263, %v258, 0
          %267 = vmatprep.subr.mxu0 0.0
          %268 = vmatpush1.msra.mxu0 %v259
          %269 = vmatprep.subr.mxu0 0.0
          %270 = vmatpush1.msra.mxu0 %v260
          %271 = vmatprep.subr.mxu0 0.0
          %272 = vmatpush1.msra.mxu0 %v261
          %273 = vmatprep.subr.mxu0 0.0
          %274 = vmatpush1.msra.mxu0 %v262
          %275 = vmatprep.subr.mxu0 0.0
          %276 = vmatpush1.msra.mxu0 0.0
          %277 = vmatprep.subr.mxu0 0.0
          %278 = vmatpush1.msra.mxu0 0.0
          %279 = vmatprep.subr.mxu0 0.0
          %280 = vmatpush1.msra.mxu0 0.0
          %281 = vmatprep.subr.mxu0 0.0
          %282 = vmatpush1.msra.mxu0 0.0
          %283 = vmatprep.subr.mxu0 0.0
          %284 = vmatpush1.msra.mxu0 0.0
          %285 = vmatprep.subr.mxu0 0.0
          %286 = vmatpush1.msra.mxu0 0.0
          %287 = vmatprep.subr.mxu0 0.0
          %288 = vmatpush1.msra.mxu0 0.0
          %289 = vmatprep.subr.mxu0 0.0
          %290 = vmatpush1.msra.mxu0 0.0
          %291 = vmatprep.subr.mxu0 0.0
          %292 = vmatpush1.msra.mxu0 0.0
          %293 = vmatprep.subr.mxu0 0.0
          %294 = vmatpush1.msra.mxu0 0.0
          %295 = vmatprep.subr.mxu0 0.0
          %296 = vmatpush1.msra.mxu0 0.0
          %297 = vmatprep.subr.mxu0 0.0
          %298 = vmatpush1.msra.mxu0 0.0
          %299 = vmatprep.subr.mxu0 0.0
          %300 = vmatpush1.msra.mxu0 0.0
          %301 = vmatprep.subr.mxu0 0.0
          %302 = vmatpush1.msra.mxu0 0.0
          %303 = vmatprep.subr.mxu0 0.0
          %304 = vmatpush1.msra.mxu0 0.0
          %305 = vmatprep.subr.mxu0 0.0
          %306 = vmatpush1.msra.mxu0 0.0
          %307 = vmatprep.subr.mxu0 0.0
          %308 = vmatpush1.msra.mxu0 0.0
          %309 = vmatprep.subr.mxu0 0.0
          %310 = vmatpush1.msra.mxu0 0.0
          %311 = vmatprep.subr.mxu0 0.0
          %312 = vmatpush1.msra.mxu0 0.0
          %313 = vmatprep.subr.mxu0 0.0
          %314 = vmatpush1.msra.mxu0 0.0
          %315 = vmatprep.subr.mxu0 0.0
          %316 = vmatpush1.msra.mxu0 0.0
          %317 = vmatprep.subr.mxu0 0.0
          %318 = vmatpush1.msra.mxu0 0.0
          %319 = vmatprep.subr.mxu0 0.0
          %320 = vmatpush1.msra.mxu0 0.0
          %321 = vmatprep.subr.mxu0 0.0
          %322 = vmatpush1.msra.mxu0 0.0
          %323 = vmatprep.subr.mxu0 0.0
          %324 = vmatpush1.msra.mxu0 0.0
          %325 = vmatprep.subr.mxu0 0.0
          %326 = vmatpush1.msra.mxu0 0.0
          %327 = vmatprep.subr.mxu0 0.0
          %328 = vmatpush1.msra.mxu0 0.0
          %329 = vmatprep.subr.mxu0 0.0
          %330 = vmatpush1.msra.mxu0 0.0
          %331 = vmatprep.mubr.f32.mxu0 0.0
          %332 = vmatmul.mubr.f32.gmra.mrb[0].mxu0 %v265
          %v333 = vpop.f32.mrb[0].mxu0
          %v334 = vadd.f32 0.0, %v333
          %v335 = vpop.f32.mrb[0].mxu0
          %336 = vdwg.mxu0
          %vm337 = vcmask 523264
          %338 = vst.msk [vmem:[#allocation2] sm:$0xff] %vm337, %v334
          %v339 = vld [vmem:[%s3] sm:$0xff]
          %v340 = vld [vmem:[%s3 + $0x8] sm:$0xff]
          %v341 = vld [vmem:[%s3 + $0x10] sm:$0xff]
          %v342 = vld [vmem:[%s3 + $0x18] sm:$0xff]
          %343 = vmatprep.subr.mxu0 0.0
          %344 = vmatpush1.msra.mxu0 %v339
          %345 = vmatprep.subr.mxu0 0.0
          %346 = vmatpush1.msra.mxu0 %v340
          %347 = vmatprep.subr.mxu0 0.0
          %348 = vmatpush1.msra.mxu0 %v341
          %349 = vmatprep.subr.mxu0 0.0
          %350 = vmatpush1.msra.mxu0 %v342
          %351 = vmatprep.subr.mxu0 0.0
          %352 = vmatpush1.msra.mxu0 0.0
          %353 = vmatprep.subr.mxu0 0.0
          %354 = vmatpush1.msra.mxu0 0.0
          %355 = vmatprep.subr.mxu0 0.0
          %356 = vmatpush1.msra.mxu0 0.0
          %357 = vmatprep.subr.mxu0 0.0
          %358 = vmatpush1.msra.mxu0 0.0
          %359 = vmatprep.subr.mxu0 0.0
          %360 = vmatpush1.msra.mxu0 0.0
          %361 = vmatprep.subr.mxu0 0.0
          %362 = vmatpush1.msra.mxu0 0.0
          %363 = vmatprep.subr.mxu0 0.0
          %364 = vmatpush1.msra.mxu0 0.0
          %365 = vmatprep.subr.mxu0 0.0
          %366 = vmatpush1.msra.mxu0 0.0
          %367 = vmatprep.subr.mxu0 0.0
          %368 = vmatpush1.msra.mxu0 0.0
          %369 = vmatprep.subr.mxu0 0.0
          %370 = vmatpush1.msra.mxu0 0.0
          %371 = vmatprep.subr.mxu0 0.0
          %372 = vmatpush1.msra.mxu0 0.0
          %373 = vmatprep.subr.mxu0 0.0
          %374 = vmatpush1.msra.mxu0 0.0
          %375 = vmatprep.subr.mxu0 0.0
          %376 = vmatpush1.msra.mxu0 0.0
          %377 = vmatprep.subr.mxu0 0.0
          %378 = vmatpush1.msra.mxu0 0.0
          %379 = vmatprep.subr.mxu0 0.0
          %380 = vmatpush1.msra.mxu0 0.0
          %381 = vmatprep.subr.mxu0 0.0
          %382 = vmatpush1.msra.mxu0 0.0
          %383 = vmatprep.subr.mxu0 0.0
          %384 = vmatpush1.msra.mxu0 0.0
          %385 = vmatprep.subr.mxu0 0.0
          %386 = vmatpush1.msra.mxu0 0.0
          %387 = vmatprep.subr.mxu0 0.0
          %388 = vmatpush1.msra.mxu0 0.0
          %389 = vmatprep.subr.mxu0 0.0
          %390 = vmatpush1.msra.mxu0 0.0
          %391 = vmatprep.subr.mxu0 0.0
          %392 = vmatpush1.msra.mxu0 0.0
          %393 = vmatprep.subr.mxu0 0.0
          %394 = vmatpush1.msra.mxu0 0.0
          %395 = vmatprep.subr.mxu0 0.0
          %396 = vmatpush1.msra.mxu0 0.0
          %397 = vmatprep.subr.mxu0 0.0
          %398 = vmatpush1.msra.mxu0 0.0
          %399 = vmatprep.subr.mxu0 0.0
          %400 = vmatpush1.msra.mxu0 0.0
          %401 = vmatprep.subr.mxu0 0.0
          %402 = vmatpush1.msra.mxu0 0.0
          %403 = vmatprep.subr.mxu0 0.0
          %404 = vmatpush1.msra.mxu0 0.0
          %405 = vmatprep.subr.mxu0 0.0
          %406 = vmatpush1.msra.mxu0 0.0
          %407 = vmatprep.mubr.f32.mxu0 0.0
          %408 = vmatmul.mubr.f32.gmra.mrb[0].mxu0 %v265
          %v409 = vpop.f32.mrb[0].mxu0
          %v410 = vadd.f32 0.0, %v409
          %v411 = vpop.f32.mrb[0].mxu0
          %412 = vdwg.mxu0
          %413 = vst.msk [vmem:[#allocation3] sm:$0xff] %vm337, %v410
        $region48: #{tpu_custom_call.1} parent=39 // pred_fallthru
          _
        %s414 = smul.u32 %s27, 8
        %v415 = vld [vmem:[%s227] sm:$0xff]
        %v416 = vld [vmem:[%s1] sm:$0xff]
        %v417 = vld [vmem:[%s1 + $0x8] sm:$0xff]
        %v418 = vld [vmem:[%s1 + $0x10] sm:$0xff]
        %v419 = vld [vmem:[%s1 + $0x18] sm:$0xff]
        %vm420 = vcmask 261120
        %v422 = vsel %vm420, %v415, 0
        %424 = vmatprep.subr.mxu0 0.0
        %425 = vmatpush1.msra.mxu0 %v416
        %426 = vmatprep.subr.mxu0 0.0
        %427 = vmatpush1.msra.mxu0 %v417
        %428 = vmatprep.subr.mxu0 0.0
        %429 = vmatpush1.msra.mxu0 %v418
        %430 = vmatprep.subr.mxu0 0.0
        %431 = vmatpush1.msra.mxu0 %v419
        %432 = vmatprep.subr.mxu0 0.0
        %433 = vmatpush1.msra.mxu0 0.0
        %434 = vmatprep.subr.mxu0 0.0
        %435 = vmatpush1.msra.mxu0 0.0
        %436 = vmatprep.subr.mxu0 0.0
        %437 = vmatpush1.msra.mxu0 0.0
        %438 = vmatprep.subr.mxu0 0.0
        %439 = vmatpush1.msra.mxu0 0.0
        %440 = vmatprep.subr.mxu0 0.0
        %441 = vmatpush1.msra.mxu0 0.0
        %442 = vmatprep.subr.mxu0 0.0
        %443 = vmatpush1.msra.mxu0 0.0
        %444 = vmatprep.subr.mxu0 0.0
        %445 = vmatpush1.msra.mxu0 0.0
        %446 = vmatprep.subr.mxu0 0.0
        %447 = vmatpush1.msra.mxu0 0.0
        %448 = vmatprep.subr.mxu0 0.0
        %449 = vmatpush1.msra.mxu0 0.0
        %450 = vmatprep.subr.mxu0 0.0
        %451 = vmatpush1.msra.mxu0 0.0
        %452 = vmatprep.subr.mxu0 0.0
        %453 = vmatpush1.msra.mxu0 0.0
        %454 = vmatprep.subr.mxu0 0.0
        %455 = vmatpush1.msra.mxu0 0.0
        %456 = vmatprep.subr.mxu0 0.0
        %457 = vmatpush1.msra.mxu0 0.0
        %458 = vmatprep.subr.mxu0 0.0
        %459 = vmatpush1.msra.mxu0 0.0
        %460 = vmatprep.subr.mxu0 0.0
        %461 = vmatpush1.msra.mxu0 0.0
        %462 = vmatprep.subr.mxu0 0.0
        %463 = vmatpush1.msra.mxu0 0.0
        %464 = vmatprep.subr.mxu0 0.0
        %465 = vmatpush1.msra.mxu0 0.0
        %466 = vmatprep.subr.mxu0 0.0
        %467 = vmatpush1.msra.mxu0 0.0
        %468 = vmatprep.subr.mxu0 0.0
        %469 = vmatpush1.msra.mxu0 0.0
        %470 = vmatprep.subr.mxu0 0.0
        %471 = vmatpush1.msra.mxu0 0.0
        %472 = vmatprep.subr.mxu0 0.0
        %473 = vmatpush1.msra.mxu0 0.0
        %474 = vmatprep.subr.mxu0 0.0
        %475 = vmatpush1.msra.mxu0 0.0
        %476 = vmatprep.subr.mxu0 0.0
        %477 = vmatpush1.msra.mxu0 0.0
        %478 = vmatprep.subr.mxu0 0.0
        %479 = vmatpush1.msra.mxu0 0.0
        %480 = vmatprep.subr.mxu0 0.0
        %481 = vmatpush1.msra.mxu0 0.0
        %482 = vmatprep.subr.mxu0 0.0
        %483 = vmatpush1.msra.mxu0 0.0
        %484 = vmatprep.subr.mxu0 0.0
        %485 = vmatpush1.msra.mxu0 0.0
        %486 = vmatprep.subr.mxu0 0.0
        %487 = vmatpush1.msra.mxu0 0.0
        %488 = vmatprep.mubr.f32.mxu0 0.0
        %489 = vmatmul.mubr.f32.gmra.mrb[0].mxu0 %v422
        %v490 = vpop.f32.mrb[0].mxu0
        %v491 = vadd.f32 0.0, %v490
        %v492 = vpop.f32.mrb[0].mxu0
        %493 = vdwg.mxu0
        %v494 = vmul.f32 %v491, 0.25
        %v495 = vlaneseq
        %v496 = vshrl.u32 %v495, 7
        %v497 = vstv %s414
        %v498 = vadd.s32 %v497, %v496
        %v499 = vlaneseq
        %v500 = vand.u32 %v499, 127
        %s501 = sadd.s32 %s27, 1
        // While loop
        $region49: #{tpu_custom_call.1} parent=39 // loop_pre_header
          _
        $region50: #{tpu_custom_call.1} parent=39 // loop_header
          %s503 = sphi 0, %s505
          %p504 = scmp.ge.s32.totalorder %s503, %s501
          %v508 = vphi -1e+30, %v601
          %v509 = vphi 0.0, %v612
          %v510 = vphi 0.0, %v687
        $region51: #{tpu_custom_call.1} parent=39 // loop_header_branch
          %507 = sbr.rel (%p504) target = $region55
        $region52: #{tpu_custom_call.1} parent=39 // loop_body
          %s511 = smul.u32 %s503, 8
          %s512 = scalar_lea.vmem [#allocation2], %s511
          %v513 = vld [vmem:[%s512] sm:$0xff]
          %s514 = scalar_lea.vmem [#allocation3], %s511
          %v515 = vld [vmem:[%s514] sm:$0xff]
          %vm516 = vcmask 130048
          %v518 = vsel %vm516, %v494, 0
          %v521 = vsel %vm516, %v513, 0
          %523 = vmatprep.subr.mxu0 0.0
          %524 = vmatpush1.xpose.msra.mxu0 %v521
          %525 = vmatprep.subr.mxu0 0.0
          %526 = vmatpush1.xpose.msra.mxu0 0.0
          %527 = vmatprep.subr.mxu0 0.0
          %528 = vmatpush1.xpose.msra.mxu0 0.0
          %529 = vmatprep.subr.mxu0 0.0
          %530 = vmatpush1.xpose.msra.mxu0 0.0
          %531 = vmatprep.subr.mxu0 0.0
          %532 = vmatpush1.xpose.msra.mxu0 0.0
          %533 = vmatprep.subr.mxu0 0.0
          %534 = vmatpush1.xpose.msra.mxu0 0.0
          %535 = vmatprep.subr.mxu0 0.0
          %536 = vmatpush1.xpose.msra.mxu0 0.0
          %537 = vmatprep.subr.mxu0 0.0
          %538 = vmatpush1.xpose.msra.mxu0 0.0
          %539 = vmatprep.subr.mxu0 0.0
          %540 = vmatpush1.xpose.msra.mxu0 0.0
          %541 = vmatprep.subr.mxu0 0.0
          %542 = vmatpush1.xpose.msra.mxu0 0.0
          %543 = vmatprep.subr.mxu0 0.0
          %544 = vmatpush1.xpose.msra.mxu0 0.0
          %545 = vmatprep.subr.mxu0 0.0
          %546 = vmatpush1.xpose.msra.mxu0 0.0
          %547 = vmatprep.subr.mxu0 0.0
          %548 = vmatpush1.xpose.msra.mxu0 0.0
          %549 = vmatprep.subr.mxu0 0.0
          %550 = vmatpush1.xpose.msra.mxu0 0.0
          %551 = vmatprep.subr.mxu0 0.0
          %552 = vmatpush1.xpose.msra.mxu0 0.0
          %553 = vmatprep.subr.mxu0 0.0
          %554 = vmatpush1.xpose.msra.mxu0 0.0
          %555 = vmatprep.subr.mxu0 0.0
          %556 = vmatpush1.xpose.msra.mxu0 0.0
          %557 = vmatprep.subr.mxu0 0.0
          %558 = vmatpush1.xpose.msra.mxu0 0.0
          %559 = vmatprep.subr.mxu0 0.0
          %560 = vmatpush1.xpose.msra.mxu0 0.0
          %561 = vmatprep.subr.mxu0 0.0
          %562 = vmatpush1.xpose.msra.mxu0 0.0
          %563 = vmatprep.subr.mxu0 0.0
          %564 = vmatpush1.xpose.msra.mxu0 0.0
          %565 = vmatprep.subr.mxu0 0.0
          %566 = vmatpush1.xpose.msra.mxu0 0.0
          %567 = vmatprep.subr.mxu0 0.0
          %568 = vmatpush1.xpose.msra.mxu0 0.0
          %569 = vmatprep.subr.mxu0 0.0
          %570 = vmatpush1.xpose.msra.mxu0 0.0
          %571 = vmatprep.subr.mxu0 0.0
          %572 = vmatpush1.xpose.msra.mxu0 0.0
          %573 = vmatprep.subr.mxu0 0.0
          %574 = vmatpush1.xpose.msra.mxu0 0.0
          %575 = vmatprep.subr.mxu0 0.0
          %576 = vmatpush1.xpose.msra.mxu0 0.0
          %577 = vmatprep.subr.mxu0 0.0
          %578 = vmatpush1.xpose.msra.mxu0 0.0
          %579 = vmatprep.subr.mxu0 0.0
          %580 = vmatpush1.xpose.msra.mxu0 0.0
          %581 = vmatprep.subr.mxu0 0.0
          %582 = vmatpush1.xpose.msra.mxu0 0.0
          %583 = vmatprep.subr.mxu0 0.0
          %584 = vmatpush1.xpose.msra.mxu0 0.0
          %585 = vmatprep.subr.mxu0 0.0
          %586 = vmatpush1.xpose.msra.mxu0 0.0
          %587 = vmatprep.mubr.f32.mxu0 0.0
          %588 = vmatmul.mubr.f32.gmra.mrb[0].mxu0 %v518
          %v589 = vpop.f32.mrb[0].mxu0
          %v590 = vadd.f32 0.0, %v589
          %v591 = vpop.f32.mrb[0].mxu0
          %592 = vdwg.mxu0
          %v593 = vstv %s511
          %v594 = vadd.s32 %v593, %v500
          %vm595 = vcmp.le.s32.totalorder %v594, %v498
          %v596 = vsel %vm595, %v590, -1e+30
          %vm597 = vcmask 64512
          %v598 = vsel %vm597, %v596, -inf
          %599 = vmax.xlane.f32.xlu0 %v598
          %v600 = vpop.xlane.xlu0 %599
          %v601 = vmax.f32 %v508, %v600
          %v602 = vsub.f32 %v508, %v601
          %v603 = vmul.f32 %v602, 1.442695
          %v604 = vpow.pop %v603
          %v605 = vsub.f32 %v596, %v601
          %v606 = vmul.f32 %v605, 1.442695
          %v607 = vpow.pop %v606
          %v608 = vmul.f32 %v604, %v509
          %v609 = vsel %vm597, %v607, 0.0
          %610 = vadd.xlane.f32.xlu0 %v609
          %v611 = vpop.xlane.xlu0 %610
          %v612 = vadd.f32 %v608, %v611
          %v613 = vmul.f32 %v604, %v510
          %v615 = vsel %vm597, %v607, 0
          %617 = vmatprep.subr.mxu0 0.0
          %618 = vmatpush1.msra.mxu0 %v515
          %619 = vmatprep.subr.mxu0 0.0
          %620 = vmatpush1.msra.mxu0 0.0
          %621 = vmatprep.subr.mxu0 0.0
          %622 = vmatpush1.msra.mxu0 0.0
          %623 = vmatprep.subr.mxu0 0.0
          %624 = vmatpush1.msra.mxu0 0.0
          %625 = vmatprep.subr.mxu0 0.0
          %626 = vmatpush1.msra.mxu0 0.0
          %627 = vmatprep.subr.mxu0 0.0
          %628 = vmatpush1.msra.mxu0 0.0
          %629 = vmatprep.subr.mxu0 0.0
          %630 = vmatpush1.msra.mxu0 0.0
          %631 = vmatprep.subr.mxu0 0.0
          %632 = vmatpush1.msra.mxu0 0.0
          %633 = vmatprep.subr.mxu0 0.0
          %634 = vmatpush1.msra.mxu0 0.0
          %635 = vmatprep.subr.mxu0 0.0
          %636 = vmatpush1.msra.mxu0 0.0
          %637 = vmatprep.subr.mxu0 0.0
          %638 = vmatpush1.msra.mxu0 0.0
          %639 = vmatprep.subr.mxu0 0.0
          %640 = vmatpush1.msra.mxu0 0.0
          %641 = vmatprep.subr.mxu0 0.0
          %642 = vmatpush1.msra.mxu0 0.0
          %643 = vmatprep.subr.mxu0 0.0
          %644 = vmatpush1.msra.mxu0 0.0
          %645 = vmatprep.subr.mxu0 0.0
          %646 = vmatpush1.msra.mxu0 0.0
          %647 = vmatprep.subr.mxu0 0.0
          %648 = vmatpush1.msra.mxu0 0.0
          %649 = vmatprep.subr.mxu0 0.0
          %650 = vmatpush1.msra.mxu0 0.0
          %651 = vmatprep.subr.mxu0 0.0
          %652 = vmatpush1.msra.mxu0 0.0
          %653 = vmatprep.subr.mxu0 0.0
          %654 = vmatpush1.msra.mxu0 0.0
          %655 = vmatprep.subr.mxu0 0.0
          %656 = vmatpush1.msra.mxu0 0.0
          %657 = vmatprep.subr.mxu0 0.0
          %658 = vmatpush1.msra.mxu0 0.0
          %659 = vmatprep.subr.mxu0 0.0
          %660 = vmatpush1.msra.mxu0 0.0
          %661 = vmatprep.subr.mxu0 0.0
          %662 = vmatpush1.msra.mxu0 0.0
          %663 = vmatprep.subr.mxu0 0.0
          %664 = vmatpush1.msra.mxu0 0.0
          %665 = vmatprep.subr.mxu0 0.0
          %666 = vmatpush1.msra.mxu0 0.0
          %667 = vmatprep.subr.mxu0 0.0
          %668 = vmatpush1.msra.mxu0 0.0
          %669 = vmatprep.subr.mxu0 0.0
          %670 = vmatpush1.msra.mxu0 0.0
          %671 = vmatprep.subr.mxu0 0.0
          %672 = vmatpush1.msra.mxu0 0.0
          %673 = vmatprep.subr.mxu0 0.0
          %674 = vmatpush1.msra.mxu0 0.0
          %675 = vmatprep.subr.mxu0 0.0
          %676 = vmatpush1.msra.mxu0 0.0
          %677 = vmatprep.subr.mxu0 0.0
          %678 = vmatpush1.msra.mxu0 0.0
          %679 = vmatprep.subr.mxu0 0.0
          %680 = vmatpush1.msra.mxu0 0.0
          %681 = vmatprep.mubr.f32.mxu0 0.0
          %682 = vmatmul.mubr.f32.gmra.mrb[0].mxu0 %v615
          %v683 = vpop.f32.mrb[0].mxu0
          %v684 = vadd.f32 0.0, %v683
          %v685 = vpop.f32.mrb[0].mxu0
          %686 = vdwg.mxu0
          %v687 = vadd.f32 %v613, %v684
        $region53: #{tpu_custom_call.1} parent=39 // loop_footer
          %s505 = sadd.s32 %s503, 1
        $region54: #{tpu_custom_call.1} parent=39 // loop_footer_branch
          %502 = sbr.rel target = $region50
        $region55: #{tpu_custom_call.1} parent=39 // loop_exit
          _
        %v688 = vrcp.pop %v509
        %v689 = vmul.f32 %v510, %v688
        // While loop
        $region56: #{tpu_custom_call.1} parent=39 // loop_pre_header
          _
        $region57: #{tpu_custom_call.1} parent=39 // loop_header
          %s691 = sphi 0, %s693
          %p692 = scmp.ge.s32.totalorder %s691, %s501
          %v696 = vphi -1e+30, %v793
          %v697 = vphi 0.0, %v804
          %v698 = vphi 0.0, %v883
        $region58: #{tpu_custom_call.1} parent=39 // loop_header_branch
          %695 = sbr.rel (%p692) target = $region62
        $region59: #{tpu_custom_call.1} parent=39 // loop_body
          %s699 = smul.u32 %s691, 8
          %s700 = scalar_lea.vmem [#allocation2], %s699
          %v701 = vld [vmem:[%s700] sm:$0xff]
          %s702 = scalar_lea.vmem [#allocation3], %s699
          %v703 = vld [vmem:[%s702] sm:$0xff]
          %705 = vrot.lane.b32.xlu0 %v494, 112
          %v706 = vpop.permute.xlu0 %705
          %708 = vrot.lane.b32.xlu0 %v701, 112
          %v709 = vpop.permute.xlu0 %708
          %vm710 = vcmask 130048
          %v711 = vsel %vm710, %v706, 0
          %v713 = vsel %vm710, %v709, 0
          %715 = vmatprep.subr.mxu0 0.0
          %716 = vmatpush1.xpose.msra.mxu0 %v713
          %717 = vmatprep.subr.mxu0 0.0
          %718 = vmatpush1.xpose.msra.mxu0 0.0
          %719 = vmatprep.subr.mxu0 0.0
          %720 = vmatpush1.xpose.msra.mxu0 0.0
          %721 = vmatprep.subr.mxu0 0.0
          %722 = vmatpush1.xpose.msra.mxu0 0.0
          %723 = vmatprep.subr.mxu0 0.0
          %724 = vmatpush1.xpose.msra.mxu0 0.0
          %725 = vmatprep.subr.mxu0 0.0
          %726 = vmatpush1.xpose.msra.mxu0 0.0
          %727 = vmatprep.subr.mxu0 0.0
          %728 = vmatpush1.xpose.msra.mxu0 0.0
          %729 = vmatprep.subr.mxu0 0.0
          %730 = vmatpush1.xpose.msra.mxu0 0.0
          %731 = vmatprep.subr.mxu0 0.0
          %732 = vmatpush1.xpose.msra.mxu0 0.0
          %733 = vmatprep.subr.mxu0 0.0
          %734 = vmatpush1.xpose.msra.mxu0 0.0
          %735 = vmatprep.subr.mxu0 0.0
          %736 = vmatpush1.xpose.msra.mxu0 0.0
          %737 = vmatprep.subr.mxu0 0.0
          %738 = vmatpush1.xpose.msra.mxu0 0.0
          %739 = vmatprep.subr.mxu0 0.0
          %740 = vmatpush1.xpose.msra.mxu0 0.0
          %741 = vmatprep.subr.mxu0 0.0
          %742 = vmatpush1.xpose.msra.mxu0 0.0
          %743 = vmatprep.subr.mxu0 0.0
          %744 = vmatpush1.xpose.msra.mxu0 0.0
          %745 = vmatprep.subr.mxu0 0.0
          %746 = vmatpush1.xpose.msra.mxu0 0.0
          %747 = vmatprep.subr.mxu0 0.0
          %748 = vmatpush1.xpose.msra.mxu0 0.0
          %749 = vmatprep.subr.mxu0 0.0
          %750 = vmatpush1.xpose.msra.mxu0 0.0
          %751 = vmatprep.subr.mxu0 0.0
          %752 = vmatpush1.xpose.msra.mxu0 0.0
          %753 = vmatprep.subr.mxu0 0.0
          %754 = vmatpush1.xpose.msra.mxu0 0.0
          %755 = vmatprep.subr.mxu0 0.0
          %756 = vmatpush1.xpose.msra.mxu0 0.0
          %757 = vmatprep.subr.mxu0 0.0
          %758 = vmatpush1.xpose.msra.mxu0 0.0
          %759 = vmatprep.subr.mxu0 0.0
          %760 = vmatpush1.xpose.msra.mxu0 0.0
          %761 = vmatprep.subr.mxu0 0.0
          %762 = vmatpush1.xpose.msra.mxu0 0.0
          %763 = vmatprep.subr.mxu0 0.0
          %764 = vmatpush1.xpose.msra.mxu0 0.0
          %765 = vmatprep.subr.mxu0 0.0
          %766 = vmatpush1.xpose.msra.mxu0 0.0
          %767 = vmatprep.subr.mxu0 0.0
          %768 = vmatpush1.xpose.msra.mxu0 0.0
          %769 = vmatprep.subr.mxu0 0.0
          %770 = vmatpush1.xpose.msra.mxu0 0.0
          %771 = vmatprep.subr.mxu0 0.0
          %772 = vmatpush1.xpose.msra.mxu0 0.0
          %773 = vmatprep.subr.mxu0 0.0
          %774 = vmatpush1.xpose.msra.mxu0 0.0
          %775 = vmatprep.subr.mxu0 0.0
          %776 = vmatpush1.xpose.msra.mxu0 0.0
          %777 = vmatprep.subr.mxu0 0.0
          %778 = vmatpush1.xpose.msra.mxu0 0.0
          %779 = vmatprep.mubr.f32.mxu0 0.0
          %780 = vmatmul.mubr.f32.gmra.mrb[0].mxu0 %v711
          %v781 = vpop.f32.mrb[0].mxu0
          %v782 = vadd.f32 0.0, %v781
          %v783 = vpop.f32.mrb[0].mxu0
          %784 = vdwg.mxu0
          %v785 = vstv %s699
          %v786 = vadd.s32 %v785, %v500
          %vm787 = vcmp.le.s32.totalorder %v786, %v498
          %v788 = vsel %vm787, %v782, -1e+30
          %vm789 = vcmask 64512
          %v790 = vsel %vm789, %v788, -inf
          %791 = vmax.xlane.f32.xlu0 %v790
          %v792 = vpop.xlane.xlu0 %791
          %v793 = vmax.f32 %v696, %v792
          %v794 = vsub.f32 %v696, %v793
          %v795 = vmul.f32 %v794, 1.442695
          %v796 = vpow.pop %v795
          %v797 = vsub.f32 %v788, %v793
          %v798 = vmul.f32 %v797, 1.442695
          %v799 = vpow.pop %v798
          %v800 = vmul.f32 %v796, %v697
          %v801 = vsel %vm789, %v799, 0.0
          %802 = vadd.xlane.f32.xlu0 %v801
          %v803 = vpop.xlane.xlu0 %802
          %v804 = vadd.f32 %v800, %v803
          %v805 = vmul.f32 %v796, %v698
          %807 = vrot.lane.b32.xlu0 %v703, 112
          %v808 = vpop.permute.xlu0 %807
          %v811 = vsel %vm789, %v799, 0
          %813 = vmatprep.subr.mxu0 0.0
          %814 = vmatpush1.msra.mxu0 %v808
          %815 = vmatprep.subr.mxu0 0.0
          %816 = vmatpush1.msra.mxu0 0.0
          %817 = vmatprep.subr.mxu0 0.0
          %818 = vmatpush1.msra.mxu0 0.0
          %819 = vmatprep.subr.mxu0 0.0
          %820 = vmatpush1.msra.mxu0 0.0
          %821 = vmatprep.subr.mxu0 0.0
          %822 = vmatpush1.msra.mxu0 0.0
          %823 = vmatprep.subr.mxu0 0.0
          %824 = vmatpush1.msra.mxu0 0.0
          %825 = vmatprep.subr.mxu0 0.0
          %826 = vmatpush1.msra.mxu0 0.0
          %827 = vmatprep.subr.mxu0 0.0
          %828 = vmatpush1.msra.mxu0 0.0
          %829 = vmatprep.subr.mxu0 0.0
          %830 = vmatpush1.msra.mxu0 0.0
          %831 = vmatprep.subr.mxu0 0.0
          %832 = vmatpush1.msra.mxu0 0.0
          %833 = vmatprep.subr.mxu0 0.0
          %834 = vmatpush1.msra.mxu0 0.0
          %835 = vmatprep.subr.mxu0 0.0
          %836 = vmatpush1.msra.mxu0 0.0
          %837 = vmatprep.subr.mxu0 0.0
          %838 = vmatpush1.msra.mxu0 0.0
          %839 = vmatprep.subr.mxu0 0.0
          %840 = vmatpush1.msra.mxu0 0.0
          %841 = vmatprep.subr.mxu0 0.0
          %842 = vmatpush1.msra.mxu0 0.0
          %843 = vmatprep.subr.mxu0 0.0
          %844 = vmatpush1.msra.mxu0 0.0
          %845 = vmatprep.subr.mxu0 0.0
          %846 = vmatpush1.msra.mxu0 0.0
          %847 = vmatprep.subr.mxu0 0.0
          %848 = vmatpush1.msra.mxu0 0.0
          %849 = vmatprep.subr.mxu0 0.0
          %850 = vmatpush1.msra.mxu0 0.0
          %851 = vmatprep.subr.mxu0 0.0
          %852 = vmatpush1.msra.mxu0 0.0
          %853 = vmatprep.subr.mxu0 0.0
          %854 = vmatpush1.msra.mxu0 0.0
          %855 = vmatprep.subr.mxu0 0.0
          %856 = vmatpush1.msra.mxu0 0.0
          %857 = vmatprep.subr.mxu0 0.0
          %858 = vmatpush1.msra.mxu0 0.0
          %859 = vmatprep.subr.mxu0 0.0
          %860 = vmatpush1.msra.mxu0 0.0
          %861 = vmatprep.subr.mxu0 0.0
          %862 = vmatpush1.msra.mxu0 0.0
          %863 = vmatprep.subr.mxu0 0.0
          %864 = vmatpush1.msra.mxu0 0.0
          %865 = vmatprep.subr.mxu0 0.0
          %866 = vmatpush1.msra.mxu0 0.0
          %867 = vmatprep.subr.mxu0 0.0
          %868 = vmatpush1.msra.mxu0 0.0
          %869 = vmatprep.subr.mxu0 0.0
          %870 = vmatpush1.msra.mxu0 0.0
          %871 = vmatprep.subr.mxu0 0.0
          %872 = vmatpush1.msra.mxu0 0.0
          %873 = vmatprep.subr.mxu0 0.0
          %874 = vmatpush1.msra.mxu0 0.0
          %875 = vmatprep.subr.mxu0 0.0
          %876 = vmatpush1.msra.mxu0 0.0
          %877 = vmatprep.mubr.f32.mxu0 0.0
          %878 = vmatmul.mubr.f32.gmra.mrb[0].mxu0 %v811
          %v879 = vpop.f32.mrb[0].mxu0
          %v880 = vadd.f32 0.0, %v879
          %v881 = vpop.f32.mrb[0].mxu0
          %882 = vdwg.mxu0
          %v883 = vadd.f32 %v805, %v880
        $region60: #{tpu_custom_call.1} parent=39 // loop_footer
          %s693 = sadd.s32 %s691, 1
        $region61: #{tpu_custom_call.1} parent=39 // loop_footer_branch
          %690 = sbr.rel target = $region57
        $region62: #{tpu_custom_call.1} parent=39 // loop_exit
          _
        %v884 = vrcp.pop %v697
        %v885 = vmul.f32 %v698, %v884
        // While loop
        $region63: #{tpu_custom_call.1} parent=39 // loop_pre_header
          _
        $region64: #{tpu_custom_call.1} parent=39 // loop_header
          %s887 = sphi 0, %s889
          %p888 = scmp.ge.s32.totalorder %s887, %s501
          %v892 = vphi -1e+30, %v989
          %v893 = vphi 0.0, %v1000
          %v894 = vphi 0.0, %v1079
        $region65: #{tpu_custom_call.1} parent=39 // loop_header_branch
          %891 = sbr.rel (%p888) target = $region69
        $region66: #{tpu_custom_call.1} parent=39 // loop_body
          %s895 = smul.u32 %s887, 8
          %s896 = scalar_lea.vmem [#allocation2], %s895
          %v897 = vld [vmem:[%s896] sm:$0xff]
          %s898 = scalar_lea.vmem [#allocation3], %s895
          %v899 = vld [vmem:[%s898] sm:$0xff]
          %901 = vrot.lane.b32.xlu0 %v494, 96
          %v902 = vpop.permute.xlu0 %901
          %904 = vrot.lane.b32.xlu0 %v897, 96
          %v905 = vpop.permute.xlu0 %904
          %vm906 = vcmask 130048
          %v907 = vsel %vm906, %v902, 0
          %v909 = vsel %vm906, %v905, 0
          %911 = vmatprep.subr.mxu0 0.0
          %912 = vmatpush1.xpose.msra.mxu0 %v909
          %913 = vmatprep.subr.mxu0 0.0
          %914 = vmatpush1.xpose.msra.mxu0 0.0
          %915 = vmatprep.subr.mxu0 0.0
          %916 = vmatpush1.xpose.msra.mxu0 0.0
          %917 = vmatprep.subr.mxu0 0.0
          %918 = vmatpush1.xpose.msra.mxu0 0.0
          %919 = vmatprep.subr.mxu0 0.0
          %920 = vmatpush1.xpose.msra.mxu0 0.0
          %921 = vmatprep.subr.mxu0 0.0
          %922 = vmatpush1.xpose.msra.mxu0 0.0
          %923 = vmatprep.subr.mxu0 0.0
          %924 = vmatpush1.xpose.msra.mxu0 0.0
          %925 = vmatprep.subr.mxu0 0.0
          %926 = vmatpush1.xpose.msra.mxu0 0.0
          %927 = vmatprep.subr.mxu0 0.0
          %928 = vmatpush1.xpose.msra.mxu0 0.0
          %929 = vmatprep.subr.mxu0 0.0
          %930 = vmatpush1.xpose.msra.mxu0 0.0
          %931 = vmatprep.subr.mxu0 0.0
          %932 = vmatpush1.xpose.msra.mxu0 0.0
          %933 = vmatprep.subr.mxu0 0.0
          %934 = vmatpush1.xpose.msra.mxu0 0.0
          %935 = vmatprep.subr.mxu0 0.0
          %936 = vmatpush1.xpose.msra.mxu0 0.0
          %937 = vmatprep.subr.mxu0 0.0
          %938 = vmatpush1.xpose.msra.mxu0 0.0
          %939 = vmatprep.subr.mxu0 0.0
          %940 = vmatpush1.xpose.msra.mxu0 0.0
          %941 = vmatprep.subr.mxu0 0.0
          %942 = vmatpush1.xpose.msra.mxu0 0.0
          %943 = vmatprep.subr.mxu0 0.0
          %944 = vmatpush1.xpose.msra.mxu0 0.0
          %945 = vmatprep.subr.mxu0 0.0
          %946 = vmatpush1.xpose.msra.mxu0 0.0
          %947 = vmatprep.subr.mxu0 0.0
          %948 = vmatpush1.xpose.msra.mxu0 0.0
          %949 = vmatprep.subr.mxu0 0.0
          %950 = vmatpush1.xpose.msra.mxu0 0.0
          %951 = vmatprep.subr.mxu0 0.0
          %952 = vmatpush1.xpose.msra.mxu0 0.0
          %953 = vmatprep.subr.mxu0 0.0
          %954 = vmatpush1.xpose.msra.mxu0 0.0
          %955 = vmatprep.subr.mxu0 0.0
          %956 = vmatpush1.xpose.msra.mxu0 0.0
          %957 = vmatprep.subr.mxu0 0.0
          %958 = vmatpush1.xpose.msra.mxu0 0.0
          %959 = vmatprep.subr.mxu0 0.0
          %960 = vmatpush1.xpose.msra.mxu0 0.0
          %961 = vmatprep.subr.mxu0 0.0
          %962 = vmatpush1.xpose.msra.mxu0 0.0
          %963 = vmatprep.subr.mxu0 0.0
          %964 = vmatpush1.xpose.msra.mxu0 0.0
          %965 = vmatprep.subr.mxu0 0.0
          %966 = vmatpush1.xpose.msra.mxu0 0.0
          %967 = vmatprep.subr.mxu0 0.0
          %968 = vmatpush1.xpose.msra.mxu0 0.0
          %969 = vmatprep.subr.mxu0 0.0
          %970 = vmatpush1.xpose.msra.mxu0 0.0
          %971 = vmatprep.subr.mxu0 0.0
          %972 = vmatpush1.xpose.msra.mxu0 0.0
          %973 = vmatprep.subr.mxu0 0.0
          %974 = vmatpush1.xpose.msra.mxu0 0.0
          %975 = vmatprep.mubr.f32.mxu0 0.0
          %976 = vmatmul.mubr.f32.gmra.mrb[0].mxu0 %v907
          %v977 = vpop.f32.mrb[0].mxu0
          %v978 = vadd.f32 0.0, %v977
          %v979 = vpop.f32.mrb[0].mxu0
          %980 = vdwg.mxu0
          %v981 = vstv %s895
          %v982 = vadd.s32 %v981, %v500
          %vm983 = vcmp.le.s32.totalorder %v982, %v498
          %v984 = vsel %vm983, %v978, -1e+30
          %vm985 = vcmask 64512
          %v986 = vsel %vm985, %v984, -inf
          %987 = vmax.xlane.f32.xlu0 %v986
          %v988 = vpop.xlane.xlu0 %987
          %v989 = vmax.f32 %v892, %v988
          %v990 = vsub.f32 %v892, %v989
          %v991 = vmul.f32 %v990, 1.442695
          %v992 = vpow.pop %v991
          %v993 = vsub.f32 %v984, %v989
          %v994 = vmul.f32 %v993, 1.442695
          %v995 = vpow.pop %v994
          %v996 = vmul.f32 %v992, %v893
          %v997 = vsel %vm985, %v995, 0.0
          %998 = vadd.xlane.f32.xlu0 %v997
          %v999 = vpop.xlane.xlu0 %998
          %v1000 = vadd.f32 %v996, %v999
          %v1001 = vmul.f32 %v992, %v894
          %1003 = vrot.lane.b32.xlu0 %v899, 96
          %v1004 = vpop.permute.xlu0 %1003
          %v1007 = vsel %vm985, %v995, 0
          %1009 = vmatprep.subr.mxu0 0.0
          %1010 = vmatpush1.msra.mxu0 %v1004
          %1011 = vmatprep.subr.mxu0 0.0
          %1012 = vmatpush1.msra.mxu0 0.0
          %1013 = vmatprep.subr.mxu0 0.0
          %1014 = vmatpush1.msra.mxu0 0.0
          %1015 = vmatprep.subr.mxu0 0.0
          %1016 = vmatpush1.msra.mxu0 0.0
          %1017 = vmatprep.subr.mxu0 0.0
          %1018 = vmatpush1.msra.mxu0 0.0
          %1019 = vmatprep.subr.mxu0 0.0
          %1020 = vmatpush1.msra.mxu0 0.0
          %1021 = vmatprep.subr.mxu0 0.0
          %1022 = vmatpush1.msra.mxu0 0.0
          %1023 = vmatprep.subr.mxu0 0.0
          %1024 = vmatpush1.msra.mxu0 0.0
          %1025 = vmatprep.subr.mxu0 0.0
          %1026 = vmatpush1.msra.mxu0 0.0
          %1027 = vmatprep.subr.mxu0 0.0
          %1028 = vmatpush1.msra.mxu0 0.0
          %1029 = vmatprep.subr.mxu0 0.0
          %1030 = vmatpush1.msra.mxu0 0.0
          %1031 = vmatprep.subr.mxu0 0.0
          %1032 = vmatpush1.msra.mxu0 0.0
          %1033 = vmatprep.subr.mxu0 0.0
          %1034 = vmatpush1.msra.mxu0 0.0
          %1035 = vmatprep.subr.mxu0 0.0
          %1036 = vmatpush1.msra.mxu0 0.0
          %1037 = vmatprep.subr.mxu0 0.0
          %1038 = vmatpush1.msra.mxu0 0.0
          %1039 = vmatprep.subr.mxu0 0.0
          %1040 = vmatpush1.msra.mxu0 0.0
          %1041 = vmatprep.subr.mxu0 0.0
          %1042 = vmatpush1.msra.mxu0 0.0
          %1043 = vmatprep.subr.mxu0 0.0
          %1044 = vmatpush1.msra.mxu0 0.0
          %1045 = vmatprep.subr.mxu0 0.0
          %1046 = vmatpush1.msra.mxu0 0.0
          %1047 = vmatprep.subr.mxu0 0.0
          %1048 = vmatpush1.msra.mxu0 0.0
          %1049 = vmatprep.subr.mxu0 0.0
          %1050 = vmatpush1.msra.mxu0 0.0
          %1051 = vmatprep.subr.mxu0 0.0
          %1052 = vmatpush1.msra.mxu0 0.0
          %1053 = vmatprep.subr.mxu0 0.0
          %1054 = vmatpush1.msra.mxu0 0.0
          %1055 = vmatprep.subr.mxu0 0.0
          %1056 = vmatpush1.msra.mxu0 0.0
          %1057 = vmatprep.subr.mxu0 0.0
          %1058 = vmatpush1.msra.mxu0 0.0
          %1059 = vmatprep.subr.mxu0 0.0
          %1060 = vmatpush1.msra.mxu0 0.0
          %1061 = vmatprep.subr.mxu0 0.0
          %1062 = vmatpush1.msra.mxu0 0.0
          %1063 = vmatprep.subr.mxu0 0.0
          %1064 = vmatpush1.msra.mxu0 0.0
          %1065 = vmatprep.subr.mxu0 0.0
          %1066 = vmatpush1.msra.mxu0 0.0
          %1067 = vmatprep.subr.mxu0 0.0
          %1068 = vmatpush1.msra.mxu0 0.0
          %1069 = vmatprep.subr.mxu0 0.0
          %1070 = vmatpush1.msra.mxu0 0.0
          %1071 = vmatprep.subr.mxu0 0.0
          %1072 = vmatpush1.msra.mxu0 0.0
          %1073 = vmatprep.mubr.f32.mxu0 0.0
          %1074 = vmatmul.mubr.f32.gmra.mrb[0].mxu0 %v1007
          %v1075 = vpop.f32.mrb[0].mxu0
          %v1076 = vadd.f32 0.0, %v1075
          %v1077 = vpop.f32.mrb[0].mxu0
          %1078 = vdwg.mxu0
          %v1079 = vadd.f32 %v1001, %v1076
        $region67: #{tpu_custom_call.1} parent=39 // loop_footer
          %s889 = sadd.s32 %s887, 1
        $region68: #{tpu_custom_call.1} parent=39 // loop_footer_branch
          %886 = sbr.rel target = $region64
        $region69: #{tpu_custom_call.1} parent=39 // loop_exit
          _
        %v1080 = vrcp.pop %v893
        %v1081 = vmul.f32 %v894, %v1080
        // While loop
        $region70: #{tpu_custom_call.1} parent=39 // loop_pre_header
          _
        $region71: #{tpu_custom_call.1} parent=39 // loop_header
          %s1083 = sphi 0, %s1085
          %p1084 = scmp.ge.s32.totalorder %s1083, %s501
          %v1088 = vphi -1e+30, %v1185
          %v1089 = vphi 0.0, %v1196
          %v1090 = vphi 0.0, %v1275
        $region72: #{tpu_custom_call.1} parent=39 // loop_header_branch
          %1087 = sbr.rel (%p1084) target = $region76
        $region73: #{tpu_custom_call.1} parent=39 // loop_body
          %s1091 = smul.u32 %s1083, 8
          %s1092 = scalar_lea.vmem [#allocation2], %s1091
          %v1093 = vld [vmem:[%s1092] sm:$0xff]
          %s1094 = scalar_lea.vmem [#allocation3], %s1091
          %v1095 = vld [vmem:[%s1094] sm:$0xff]
          %1097 = vrot.lane.b32.xlu0 %v494, 80
          %v1098 = vpop.permute.xlu0 %1097
          %1100 = vrot.lane.b32.xlu0 %v1093, 80
          %v1101 = vpop.permute.xlu0 %1100
          %vm1102 = vcmask 130048
          %v1103 = vsel %vm1102, %v1098, 0
          %v1105 = vsel %vm1102, %v1101, 0
          %1107 = vmatprep.subr.mxu0 0.0
          %1108 = vmatpush1.xpose.msra.mxu0 %v1105
          %1109 = vmatprep.subr.mxu0 0.0
          %1110 = vmatpush1.xpose.msra.mxu0 0.0
          %1111 = vmatprep.subr.mxu0 0.0
          %1112 = vmatpush1.xpose.msra.mxu0 0.0
          %1113 = vmatprep.subr.mxu0 0.0
          %1114 = vmatpush1.xpose.msra.mxu0 0.0
          %1115 = vmatprep.subr.mxu0 0.0
          %1116 = vmatpush1.xpose.msra.mxu0 0.0
          %1117 = vmatprep.subr.mxu0 0.0
          %1118 = vmatpush1.xpose.msra.mxu0 0.0
          %1119 = vmatprep.subr.mxu0 0.0
          %1120 = vmatpush1.xpose.msra.mxu0 0.0
          %1121 = vmatprep.subr.mxu0 0.0
          %1122 = vmatpush1.xpose.msra.mxu0 0.0
          %1123 = vmatprep.subr.mxu0 0.0
          %1124 = vmatpush1.xpose.msra.mxu0 0.0
          %1125 = vmatprep.subr.mxu0 0.0
          %1126 = vmatpush1.xpose.msra.mxu0 0.0
          %1127 = vmatprep.subr.mxu0 0.0
          %1128 = vmatpush1.xpose.msra.mxu0 0.0
          %1129 = vmatprep.subr.mxu0 0.0
          %1130 = vmatpush1.xpose.msra.mxu0 0.0
          %1131 = vmatprep.subr.mxu0 0.0
          %1132 = vmatpush1.xpose.msra.mxu0 0.0
          %1133 = vmatprep.subr.mxu0 0.0
          %1134 = vmatpush1.xpose.msra.mxu0 0.0
          %1135 = vmatprep.subr.mxu0 0.0
          %1136 = vmatpush1.xpose.msra.mxu0 0.0
          %1137 = vmatprep.subr.mxu0 0.0
          %1138 = vmatpush1.xpose.msra.mxu0 0.0
          %1139 = vmatprep.subr.mxu0 0.0
          %1140 = vmatpush1.xpose.msra.mxu0 0.0
          %1141 = vmatprep.subr.mxu0 0.0
          %1142 = vmatpush1.xpose.msra.mxu0 0.0
          %1143 = vmatprep.subr.mxu0 0.0
          %1144 = vmatpush1.xpose.msra.mxu0 0.0
          %1145 = vmatprep.subr.mxu0 0.0
          %1146 = vmatpush1.xpose.msra.mxu0 0.0
          %1147 = vmatprep.subr.mxu0 0.0
          %1148 = vmatpush1.xpose.msra.mxu0 0.0
          %1149 = vmatprep.subr.mxu0 0.0
          %1150 = vmatpush1.xpose.msra.mxu0 0.0
          %1151 = vmatprep.subr.mxu0 0.0
          %1152 = vmatpush1.xpose.msra.mxu0 0.0
          %1153 = vmatprep.subr.mxu0 0.0
          %1154 = vmatpush1.xpose.msra.mxu0 0.0
          %1155 = vmatprep.subr.mxu0 0.0
          %1156 = vmatpush1.xpose.msra.mxu0 0.0
          %1157 = vmatprep.subr.mxu0 0.0
          %1158 = vmatpush1.xpose.msra.mxu0 0.0
          %1159 = vmatprep.subr.mxu0 0.0
          %1160 = vmatpush1.xpose.msra.mxu0 0.0
          %1161 = vmatprep.subr.mxu0 0.0
          %1162 = vmatpush1.xpose.msra.mxu0 0.0
          %1163 = vmatprep.subr.mxu0 0.0
          %1164 = vmatpush1.xpose.msra.mxu0 0.0
          %1165 = vmatprep.subr.mxu0 0.0
          %1166 = vmatpush1.xpose.msra.mxu0 0.0
          %1167 = vmatprep.subr.mxu0 0.0
          %1168 = vmatpush1.xpose.msra.mxu0 0.0
          %1169 = vmatprep.subr.mxu0 0.0
          %1170 = vmatpush1.xpose.msra.mxu0 0.0
          %1171 = vmatprep.mubr.f32.mxu0 0.0
          %1172 = vmatmul.mubr.f32.gmra.mrb[0].mxu0 %v1103
          %v1173 = vpop.f32.mrb[0].mxu0
          %v1174 = vadd.f32 0.0, %v1173
          %v1175 = vpop.f32.mrb[0].mxu0
          %1176 = vdwg.mxu0
          %v1177 = vstv %s1091
          %v1178 = vadd.s32 %v1177, %v500
          %vm1179 = vcmp.le.s32.totalorder %v1178, %v498
          %v1180 = vsel %vm1179, %v1174, -1e+30
          %vm1181 = vcmask 64512
          %v1182 = vsel %vm1181, %v1180, -inf
          %1183 = vmax.xlane.f32.xlu0 %v1182
          %v1184 = vpop.xlane.xlu0 %1183
          %v1185 = vmax.f32 %v1088, %v1184
          %v1186 = vsub.f32 %v1088, %v1185
          %v1187 = vmul.f32 %v1186, 1.442695
          %v1188 = vpow.pop %v1187
          %v1189 = vsub.f32 %v1180, %v1185
          %v1190 = vmul.f32 %v1189, 1.442695
          %v1191 = vpow.pop %v1190
          %v1192 = vmul.f32 %v1188, %v1089
          %v1193 = vsel %vm1181, %v1191, 0.0
          %1194 = vadd.xlane.f32.xlu0 %v1193
          %v1195 = vpop.xlane.xlu0 %1194
          %v1196 = vadd.f32 %v1192, %v1195
          %v1197 = vmul.f32 %v1188, %v1090
          %1199 = vrot.lane.b32.xlu0 %v1095, 80
          %v1200 = vpop.permute.xlu0 %1199
          %v1203 = vsel %vm1181, %v1191, 0
          %1205 = vmatprep.subr.mxu0 0.0
          %1206 = vmatpush1.msra.mxu0 %v1200
          %1207 = vmatprep.subr.mxu0 0.0
          %1208 = vmatpush1.msra.mxu0 0.0
          %1209 = vmatprep.subr.mxu0 0.0
          %1210 = vmatpush1.msra.mxu0 0.0
          %1211 = vmatprep.subr.mxu0 0.0
          %1212 = vmatpush1.msra.mxu0 0.0
          %1213 = vmatprep.subr.mxu0 0.0
          %1214 = vmatpush1.msra.mxu0 0.0
          %1215 = vmatprep.subr.mxu0 0.0
          %1216 = vmatpush1.msra.mxu0 0.0
          %1217 = vmatprep.subr.mxu0 0.0
          %1218 = vmatpush1.msra.mxu0 0.0
          %1219 = vmatprep.subr.mxu0 0.0
          %1220 = vmatpush1.msra.mxu0 0.0
          %1221 = vmatprep.subr.mxu0 0.0
          %1222 = vmatpush1.msra.mxu0 0.0
          %1223 = vmatprep.subr.mxu0 0.0
          %1224 = vmatpush1.msra.mxu0 0.0
          %1225 = vmatprep.subr.mxu0 0.0
          %1226 = vmatpush1.msra.mxu0 0.0
          %1227 = vmatprep.subr.mxu0 0.0
          %1228 = vmatpush1.msra.mxu0 0.0
          %1229 = vmatprep.subr.mxu0 0.0
          %1230 = vmatpush1.msra.mxu0 0.0
          %1231 = vmatprep.subr.mxu0 0.0
          %1232 = vmatpush1.msra.mxu0 0.0
          %1233 = vmatprep.subr.mxu0 0.0
          %1234 = vmatpush1.msra.mxu0 0.0
          %1235 = vmatprep.subr.mxu0 0.0
          %1236 = vmatpush1.msra.mxu0 0.0
          %1237 = vmatprep.subr.mxu0 0.0
          %1238 = vmatpush1.msra.mxu0 0.0
          %1239 = vmatprep.subr.mxu0 0.0
          %1240 = vmatpush1.msra.mxu0 0.0
          %1241 = vmatprep.subr.mxu0 0.0
          %1242 = vmatpush1.msra.mxu0 0.0
          %1243 = vmatprep.subr.mxu0 0.0
          %1244 = vmatpush1.msra.mxu0 0.0
          %1245 = vmatprep.subr.mxu0 0.0
          %1246 = vmatpush1.msra.mxu0 0.0
          %1247 = vmatprep.subr.mxu0 0.0
          %1248 = vmatpush1.msra.mxu0 0.0
          %1249 = vmatprep.subr.mxu0 0.0
          %1250 = vmatpush1.msra.mxu0 0.0
          %1251 = vmatprep.subr.mxu0 0.0
          %1252 = vmatpush1.msra.mxu0 0.0
          %1253 = vmatprep.subr.mxu0 0.0
          %1254 = vmatpush1.msra.mxu0 0.0
          %1255 = vmatprep.subr.mxu0 0.0
          %1256 = vmatpush1.msra.mxu0 0.0
          %1257 = vmatprep.subr.mxu0 0.0
          %1258 = vmatpush1.msra.mxu0 0.0
          %1259 = vmatprep.subr.mxu0 0.0
          %1260 = vmatpush1.msra.mxu0 0.0
          %1261 = vmatprep.subr.mxu0 0.0
          %1262 = vmatpush1.msra.mxu0 0.0
          %1263 = vmatprep.subr.mxu0 0.0
          %1264 = vmatpush1.msra.mxu0 0.0
          %1265 = vmatprep.subr.mxu0 0.0
          %1266 = vmatpush1.msra.mxu0 0.0
          %1267 = vmatprep.subr.mxu0 0.0
          %1268 = vmatpush1.msra.mxu0 0.0
          %1269 = vmatprep.mubr.f32.mxu0 0.0
          %1270 = vmatmul.mubr.f32.gmra.mrb[0].mxu0 %v1203
          %v1271 = vpop.f32.mrb[0].mxu0
          %v1272 = vadd.f32 0.0, %v1271
          %v1273 = vpop.f32.mrb[0].mxu0
          %1274 = vdwg.mxu0
          %v1275 = vadd.f32 %v1197, %v1272
        $region74: #{tpu_custom_call.1} parent=39 // loop_footer
          %s1085 = sadd.s32 %s1083, 1
        $region75: #{tpu_custom_call.1} parent=39 // loop_footer_branch
          %1082 = sbr.rel target = $region71
        $region76: #{tpu_custom_call.1} parent=39 // loop_exit
          _
        %v1276 = vrcp.pop %v1089
        %v1277 = vmul.f32 %v1090, %v1276
        %1279 = vrot.lane.b32.xlu0 %v885, 16
        %v1280 = vpop.permute.xlu0 %1279
        %1283 = vrot.lane.b32.xlu0 %v1081, 32
        %v1284 = vpop.permute.xlu0 %1283
        %1287 = vrot.lane.b32.xlu0 %v1277, 48
        %v1288 = vpop.permute.xlu0 %1287
        %vm1290 = vcmask 130048
        %v1291 = vsel %vm1290, %v689, %v1280
        %v1292 = vsel %vm420, %v1291, %v1284
        %vm1293 = vcmask 392192
        %v1294 = vsel %vm1293, %v1292, %v1288
        %v1295 = vld [vmem:[%s4] sm:$0xff]
        %v1296 = vld [vmem:[%s4 + $0x8] sm:$0xff]
        %v1297 = vld [vmem:[%s4 + $0x10] sm:$0xff]
        %v1298 = vld [vmem:[%s4 + $0x18] sm:$0xff]
        %v1299 = vld [vmem:[%s4 + $0x20] sm:$0xff]
        %v1300 = vld [vmem:[%s4 + $0x28] sm:$0xff]
        %v1301 = vld [vmem:[%s4 + $0x30] sm:$0xff]
        %v1302 = vld [vmem:[%s4 + $0x38] sm:$0xff]
        %vm1303 = vcmask 523264
        %v1305 = vsel %vm1303, %v1294, 0
        %1307 = vmatprep.subr.mxu0 0.0
        %1308 = vmatpush1.msra.mxu0 %v1295
        %1309 = vmatprep.subr.mxu0 0.0
        %1310 = vmatpush1.msra.mxu0 %v1296
        %1311 = vmatprep.subr.mxu0 0.0
        %1312 = vmatpush1.msra.mxu0 %v1297
        %1313 = vmatprep.subr.mxu0 0.0
        %1314 = vmatpush1.msra.mxu0 %v1298
        %1315 = vmatprep.subr.mxu0 0.0
        %1316 = vmatpush1.msra.mxu0 %v1299
        %1317 = vmatprep.subr.mxu0 0.0
        %1318 = vmatpush1.msra.mxu0 %v1300
        %1319 = vmatprep.subr.mxu0 0.0
        %1320 = vmatpush1.msra.mxu0 %v1301
        %1321 = vmatprep.subr.mxu0 0.0
        %1322 = vmatpush1.msra.mxu0 %v1302
        %1323 = vmatprep.subr.mxu0 0.0
        %1324 = vmatpush1.msra.mxu0 0.0
        %1325 = vmatprep.subr.mxu0 0.0
        %1326 = vmatpush1.msra.mxu0 0.0
        %1327 = vmatprep.subr.mxu0 0.0
        %1328 = vmatpush1.msra.mxu0 0.0
        %1329 = vmatprep.subr.mxu0 0.0
        %1330 = vmatpush1.msra.mxu0 0.0
        %1331 = vmatprep.subr.mxu0 0.0
        %1332 = vmatpush1.msra.mxu0 0.0
        %1333 = vmatprep.subr.mxu0 0.0
        %1334 = vmatpush1.msra.mxu0 0.0
        %1335 = vmatprep.subr.mxu0 0.0
        %1336 = vmatpush1.msra.mxu0 0.0
        %1337 = vmatprep.subr.mxu0 0.0
        %1338 = vmatpush1.msra.mxu0 0.0
        %1339 = vmatprep.subr.mxu0 0.0
        %1340 = vmatpush1.msra.mxu0 0.0
        %1341 = vmatprep.subr.mxu0 0.0
        %1342 = vmatpush1.msra.mxu0 0.0
        %1343 = vmatprep.subr.mxu0 0.0
        %1344 = vmatpush1.msra.mxu0 0.0
        %1345 = vmatprep.subr.mxu0 0.0
        %1346 = vmatpush1.msra.mxu0 0.0
        %1347 = vmatprep.subr.mxu0 0.0
        %1348 = vmatpush1.msra.mxu0 0.0
        %1349 = vmatprep.subr.mxu0 0.0
        %1350 = vmatpush1.msra.mxu0 0.0
        %1351 = vmatprep.subr.mxu0 0.0
        %1352 = vmatpush1.msra.mxu0 0.0
        %1353 = vmatprep.subr.mxu0 0.0
        %1354 = vmatpush1.msra.mxu0 0.0
        %1355 = vmatprep.subr.mxu0 0.0
        %1356 = vmatpush1.msra.mxu0 0.0
        %1357 = vmatprep.subr.mxu0 0.0
        %1358 = vmatpush1.msra.mxu0 0.0
        %1359 = vmatprep.subr.mxu0 0.0
        %1360 = vmatpush1.msra.mxu0 0.0
        %1361 = vmatprep.subr.mxu0 0.0
        %1362 = vmatpush1.msra.mxu0 0.0
        %1363 = vmatprep.subr.mxu0 0.0
        %1364 = vmatpush1.msra.mxu0 0.0
        %1365 = vmatprep.subr.mxu0 0.0
        %1366 = vmatpush1.msra.mxu0 0.0
        %1367 = vmatprep.subr.mxu0 0.0
        %1368 = vmatpush1.msra.mxu0 0.0
        %1369 = vmatprep.subr.mxu0 0.0
        %1370 = vmatpush1.msra.mxu0 0.0
        %1371 = vmatprep.mubr.f32.mxu0 0.0
        %1372 = vmatmul.mubr.f32.gmra.mrb[0].mxu0 %v1305
        %v1373 = vpop.f32.mrb[0].mxu0
        %v1374 = vadd.f32 0.0, %v1373
        %v1375 = vpop.f32.mrb[0].mxu0
        %1376 = vdwg.mxu0
        %1377 = vst.msk [vmem:[%s253] sm:$0xff] %vm420, %v1374
        %s1378 = sand.u32 %s154, 1
        %s1379 = scalar_lea.sflag [#allocation6], %s1378
        %s1380 = sand.u32 %s154, 1
        %s1381 = smul.addr %s1380, 8
        %s1382 = scalar_lea.vmem [#allocation7], %s1381
        // Predicated region
        $region77: #{tpu_custom_call.1} parent=39 // pred_check
          %p1383 = pneg %p164
        $region78: #{tpu_custom_call.1} parent=39 // pred_check_branch
          %1385 = sbr.rel (%p1383) target = $region80
        $region79: #{tpu_custom_call.1} parent=39 // pred_region
          %s1387 = ssub.s32 128, 128
          %1388 = vsyncadd %s1379, %s1387
          %s1389 = sadd.s32 %s27, %s26
          %s1390 = smul.addr %s1389, 128
          %s1391 = scalar_lea.hbm %s5, %s1390
          %s1393 = sshll.u32 %s1382, 4
          %s1394 = int_to_ptr.vmem [resolvable:$true] %s1393
          %1396 = dma.vmem_to_hbm [thread:$0]  %s1394, 128, %s1391, %s1379
        $region80: #{tpu_custom_call.1} parent=39 // pred_fallthru
          _
      $region40: #{tpu_custom_call.1} parent=5 // pred_fallthru
        _
      %p1397 = scmp.le.s32.totalorder 2, %s17
      // Predicated region
      $region81: #{tpu_custom_call.1} parent=5 // pred_check
        %p1398 = pneg %p1397
      $region82: #{tpu_custom_call.1} parent=5 // pred_check_branch
        %1400 = sbr.rel (%p1398) target = $region84
      $region83: #{tpu_custom_call.1} parent=5 // pred_region
        %s1401 = ssub.s32 %s17, 2
        // Predicated region
        $region85: #{tpu_custom_call.1} parent=83 // pred_check
          %p1402 = pneg %p170
        $region86: #{tpu_custom_call.1} parent=83 // pred_check_branch
          %1404 = sbr.rel (%p1402) target = $region88
        $region87: #{tpu_custom_call.1} parent=83 // pred_region
          %s1405 = sand.u32 %s155, 1
          %s1406 = scalar_lea.sflag [#allocation6], %s1405
          %s1407 = sand.u32 %s155, 1
          %s1408 = smul.addr %s1407, 8
          %s1409 = scalar_lea.vmem [#allocation7], %s1408
          %1410 = dma.done %s1406, 128
        $region88: #{tpu_custom_call.1} parent=83 // pred_fallthru
          _
      $region84: #{tpu_custom_call.1} parent=5 // pred_fallthru
        _
    $region6: #{tpu_custom_call.1} parent=1 // loop_footer
      %s21 = sadd.s32 1, %s17
    $region7: #{tpu_custom_call.1} parent=1 // loop_footer_branch
      %16 = sbr.rel target = $region3
    $region8: #{tpu_custom_call.1} parent=1 // loop_exit
      _
    %1411 = vsyncpa [#allocation5], 1
    %s1412 = scalar_lea.sflag [#allocation5], 1
    %1413 = vsyncpa %s1412, 1
    %1414 = vsyncpa [#allocation6], 1
    %s1415 = scalar_lea.sflag [#allocation6], 1
    %1416 = vsyncpa %s1415, 1

</llo_original>
